<compile_context>
chip_gen: v7x
topology: tpu7x:2x2x1
jax: 0.10.0
libtpu: 0.0.40
codegen_flags: <defaults>
</compile_context>

<pallas_src>
import jax
import jax.numpy as jnp
import numpy as np
from jax.experimental import pallas as pl
from jax.experimental.pallas import tpu as pltpu


def match_kernel(feat_ref, fbias_ref, wf_ref, w1_ref, w2_ref, p_ref, o_ref):
    # feat_ref:  (Mg, F)    bf16  proposal features, batch folded into rows (Mg = Bblk*K)
    # fbias_ref: (Mg, H)    f32   where(objectness_mask, lang_emb @ WfL^T + b_fuse, -inf)
    # wf_ref:    (F, H)     bf16  fuse conv weight, feature slice (transposed)
    # w1_ref:    (H, H)     bf16  match conv1 weight (transposed)
    # w2_ref:    (H, H)     bf16  match conv2 weight (transposed)
    # p_ref:     (8, H)     f32   rows: b1, s1, t1, b2, s2, t2, w3, b3/H
    # o_ref:     (1, 1, Mg) f32   lane-dense scores for the Mg rows of this step
    b1 = p_ref[0, :][None, :]
    s1 = p_ref[1, :][None, :]
    t1 = p_ref[2, :][None, :]
    b2 = p_ref[3, :][None, :]
    s2 = p_ref[4, :][None, :]
    t2 = p_ref[5, :][None, :]
    w3 = p_ref[6, :][None, :]
    b3h = p_ref[7, :][None, :]

    # fuse: Conv1d(128+lang -> H, 1). Language contribution, fuse bias and the
    # objectness mask are all folded into fbias (the -inf rows implement
    # `relu(x) * mask` exactly, with no lane->sublane relayout of the mask).
    pre = jnp.dot(feat_ref[...], wf_ref[...], preferred_element_type=jnp.float32)   # (Mg, H)
    fused = jnp.maximum(pre + fbias_ref[...], 0.0)

    # match[0:3]: Conv1d(H->H,1) + ReLU + BatchNorm1d (eval: folded scale/shift).
    h1 = jnp.dot(fused.astype(jnp.bfloat16), w1_ref[...],
                 preferred_element_type=jnp.float32) + b1
    h1 = jnp.maximum(h1, 0.0) * s1 + t1

    # match[3:6]: Conv1d(H->H,1) + ReLU + BatchNorm1d.
    h2 = jnp.dot(h1.astype(jnp.bfloat16), w2_ref[...],
                 preferred_element_type=jnp.float32) + b2
    h2 = jnp.maximum(h2, 0.0) * s2 + t2

    # match[6]: Conv1d(H -> 1, 1) on VPU + XLU: elementwise multiply by the w3 row,
    # transpose, then sublane-reduce -> lane-dense (1, Mg) score row.  b3 is spread
    # as b3/H so the lane sum restores it exactly.
    contrib = h2 * w3 + b3h                                    # (Mg, H) f32
    score = jnp.sum(contrib.T, axis=0, keepdims=True)          # (1, Mg)
    o_ref[...] = score[None]                                   # (1, 1, Mg)


def _num_grid_steps(B, K):
    """Grid length: 2 on chips with two TensorCores (v4/v5p/v7x), else 1."""
    kind = ""
    try:
        kind = jax.devices()[0].device_kind.lower()
    except Exception:
        pass
    two_cores = any(tag in kind for tag in ("v4", "v5p", "v7", "7x"))
    if two_cores and B % 2 == 0 and ((B // 2) * K) % 8 == 0:
        return 2
    # TODO(synk): general B would need cdiv + tail-row masking; B%2!=0 falls back to 1 step.
    return 1


def prepare_params(params, feat_channels=128):
    """One-time parameter preprocessing (hoisted out of the per-call path)."""
    F = feat_channels
    H = params["w_fuse"].shape[0]
    eps = 1e-5
    s1 = params["bn1_gamma"] / jnp.sqrt(params["bn1_var"] + eps)
    t1 = params["bn1_beta"] - params["bn1_mean"] * s1
    s2 = params["bn2_gamma"] / jnp.sqrt(params["bn2_var"] + eps)
    t2 = params["bn2_beta"] - params["bn2_mean"] * s2
    packed = jnp.stack(
        [params["b1"], s1, t1, params["b2"], s2, t2,
         params["w3"][0],
         jnp.broadcast_to(params["b3"].astype(jnp.float32) / H, (H,))],
        axis=0,
    ).astype(jnp.float32)                                          # (8, H)

    wf = params["w_fuse"]                                          # (H, 128+L); concat order [feat, lang]
    return {
        "wf_feat_t": wf[:, :F].T.astype(jnp.bfloat16),             # (F, H)
        "wf_lang_t": wf[:, F:].T.astype(jnp.float32),              # (L, H)  used by a wrapper-side GEMV
        "b_fuse": params["b_fuse"].astype(jnp.float32),            # (H,)
        "w1_t": params["w1"].T.astype(jnp.bfloat16),               # (H, H)
        "w2_t": params["w2"].T.astype(jnp.bfloat16),               # (H, H)
        "packed": packed,                                          # (8, H)
    }


@jax.jit
def match_module_forward(features, lang_emb, objectness_scores, prep):
    """features: (B, K, 128); lang_emb: (B, L); objectness_scores: (B, K, 2)."""
    B, K, F = features.shape
    H = prep["w1_t"].shape[0]

    # get_objectness_masks (votenet): argmax over the 2 objectness logits == class 1.
    mask = jnp.argmax(objectness_scores, axis=-1) == 1             # (B, K) bool

    # Language contribution of the fuse conv: one small f32 XLA GEMV per batch.
    lang_bias = lang_emb.astype(jnp.float32) @ prep["wf_lang_t"] + prep["b_fuse"]   # (B, H)

    # Fold language bias + fuse bias + objectness mask into one lane-dense additive
    # term per row:   relu(x + b) * m  ==  relu(x + where(m, b, -inf)).
    fuse_bias = jnp.where(mask[:, :, None], lang_bias[:, None, :], -jnp.inf)
    fuse_bias = fuse_bias.reshape(B * K, H).astype(jnp.float32)    # (B*K, H)

    feat2d = features.astype(jnp.bfloat16).reshape(B * K, F)       # (B*K, F)

    G = _num_grid_steps(B, K)
    Mg = (B * K) // G
    # VMEM footprint per step is well under the default scoped limit at these sizes;
    # for much larger B raise vmem_limit_bytes via CompilerParams.

    out = pl.pallas_call(
        match_kernel,
        out_shape=jax.ShapeDtypeStruct((G, 1, Mg), jnp.float32),
        grid_spec=pltpu.PrefetchScalarGridSpec(
            num_scalar_prefetch=0,
            grid=(G,),
            in_specs=[
                pl.BlockSpec((Mg, F), lambda g: (g, 0)),           # features (batch folded into M)
                pl.BlockSpec((Mg, H), lambda g: (g, 0)),           # fused lang-bias / mask term
                pl.BlockSpec((F, H), lambda g: (0, 0)),            # wf_feat
                pl.BlockSpec((H, H), lambda g: (0, 0)),            # w1
                pl.BlockSpec((H, H), lambda g: (0, 0)),            # w2
                pl.BlockSpec((8, H), lambda g: (0, 0)),            # packed per-channel params
            ],
            out_specs=pl.BlockSpec((1, 1, Mg), lambda g: (g, 0, 0)),
        ),
        compiler_params=pltpu.CompilerParams(dimension_semantics=("parallel",)),
    )(feat2d, fuse_bias, prep["wf_feat_t"], prep["w1_t"], prep["w2_t"], prep["packed"])

    return out.reshape(B, K)                                       # cluster_ref


def reference_forward(features, lang_emb, objectness_scores, params):
    B, K, _ = features.shape
    lang = jnp.broadcast_to(lang_emb[:, None, :], (B, K, lang_emb.shape[-1]))
    x = jnp.concatenate([features, lang], axis=-1).astype(jnp.float32)
    mask = (jnp.argmax(objectness_scores, axis=-1) == 1).astype(jnp.float32)[..., None]
    eps = 1e-5
    fused = jax.nn.relu(jnp.einsum("bkc,hc->bkh", x, params["w_fuse"]) + params["b_fuse"])
    fused = fused * mask
    h1 = jax.nn.relu(jnp.einsum("bkc,hc->bkh", fused, params["w1"]) + params["b1"])
    h1 = (h1 - params["bn1_mean"]) / jnp.sqrt(params["bn1_var"] + eps) * params["bn1_gamma"] + params["bn1_beta"]
    h2 = jax.nn.relu(jnp.einsum("bkc,hc->bkh", h1, params["w2"]) + params["b2"])
    h2 = (h2 - params["bn2_mean"]) / jnp.sqrt(params["bn2_var"] + eps) * params["bn2_gamma"] + params["bn2_beta"]
    return jnp.einsum("bkc,oc->bko", h2, params["w3"])[..., 0] + params["b3"][0]


def init_params(key, cin, hidden):
    ks = jax.random.split(key, 12)
    return {
        "w_fuse": jax.random.normal(ks[0], (hidden, cin), jnp.float32) / np.sqrt(cin),
        "b_fuse": jax.random.normal(ks[1], (hidden,), jnp.float32) * 0.01,
        "w1": jax.random.normal(ks[2], (hidden, hidden), jnp.float32) / np.sqrt(hidden),
        "b1": jax.random.normal(ks[3], (hidden,), jnp.float32) * 0.01,
        "bn1_gamma": 1.0 + 0.1 * jax.random.normal(ks[4], (hidden,), jnp.float32),
        "bn1_beta": 0.1 * jax.random.normal(ks[5], (hidden,), jnp.float32),
        "bn1_mean": 0.1 * jax.random.normal(ks[6], (hidden,), jnp.float32),
        "bn1_var": jnp.abs(jax.random.normal(ks[7], (hidden,), jnp.float32)) + 0.5,
        "w2": jax.random.normal(ks[8], (hidden, hidden), jnp.float32) / np.sqrt(hidden),
        "b2": jax.random.normal(ks[9], (hidden,), jnp.float32) * 0.01,
        "bn2_gamma": 1.0 + 0.1 * jax.random.normal(ks[10], (hidden,), jnp.float32),
        "bn2_beta": 0.1 * jax.random.normal(ks[11], (hidden,), jnp.float32),
        "bn2_mean": jnp.zeros((hidden,), jnp.float32),
        "bn2_var": jnp.ones((hidden,), jnp.float32),
        "w3": jax.random.normal(jax.random.PRNGKey(123), (1, hidden), jnp.float32) / np.sqrt(hidden),
        "b3": jnp.array([0.05], jnp.float32),
    }


if __name__ == "__main__":
    B = 2                # batch
    K = 256              # num_proposals (module default)
    FEAT = 128           # aggregated vote feature channels
    LANG = 256           # lang_size (module default)
    HIDDEN = 128         # hidden_size (module default)
    CIN = FEAT + LANG    # fuse input channels = lang_size + 128

    root = jax.random.PRNGKey(0)
    k_feat, k_lang, k_obj, k_par = jax.random.split(root, 4)
    features = jax.random.normal(k_feat, (B, K, FEAT), jnp.float32)          # aggregated_vote_features
    lang_emb = jax.random.normal(k_lang, (B, LANG), jnp.float32)             # lang_emb
    objectness_scores = jax.random.normal(k_obj, (B, K, 2), jnp.float32)     # -> objectness mask
    params = init_params(k_par, CIN, HIDDEN)

    prep = prepare_params(params, feat_channels=FEAT)   # one-time param prep (hoisted)

    cluster_ref = match_module_forward(features, lang_emb, objectness_scores, prep)
    cluster_ref = jax.block_until_ready(cluster_ref)

    ref = jax.block_until_ready(reference_forward(features, lang_emb, objectness_scores, params))
    assert cluster_ref.shape == (B, K)
    # Tolerance relaxed slightly vs the f32 reference because the kernel runs its
    # matmuls with bf16 inputs (f32 accumulation).
    np.testing.assert_allclose(np.asarray(cluster_ref), np.asarray(ref), rtol=5e-2, atol=5e-2)

    print("KERNEL_OK")
</pallas_src>

<mosaic_0001>
module attributes {stable_mosaic.version = 11 : i64} {
  func.func @match_kernel(%arg0: i32, %arg1: memref<512x128xbf16, #tpu.memory_space<vmem>>, %arg2: memref<512x128xf32, #tpu.memory_space<vmem>>, %arg3: memref<128x128xbf16, #tpu.memory_space<vmem>>, %arg4: memref<128x128xbf16, #tpu.memory_space<vmem>>, %arg5: memref<128x128xbf16, #tpu.memory_space<vmem>>, %arg6: memref<8x128xf32, #tpu.memory_space<vmem>>, %arg7: memref<1x1x512xf32, #tpu.memory_space<vmem>>) attributes {dimension_semantics = [#tpu.dimension_semantics<parallel>], iteration_bounds = array<i64: 1>, scalar_prefetch = 0 : i64, scratch_operands = 0 : i64, tpu.core_type = #tpu.core_type<tc>, window_params = [{transform_indices = @transform_0, window_bounds = array<i64: 512, 128>}, {transform_indices = @transform_1, window_bounds = array<i64: 512, 128>}, {pipeline_mode = #tpu.pipeline_mode<synchronous>, transform_indices = @transform_2, window_bounds = array<i64: 128, 128>}, {pipeline_mode = #tpu.pipeline_mode<synchronous>, transform_indices = @transform_3, window_bounds = array<i64: 128, 128>}, {pipeline_mode = #tpu.pipeline_mode<synchronous>, transform_indices = @transform_4, window_bounds = array<i64: 128, 128>}, {pipeline_mode = #tpu.pipeline_mode<synchronous>, transform_indices = @transform_5, window_bounds = array<i64: 8, 128>}, {transform_indices = @transform_6, window_bounds = array<i64: 1, 1, 512>}]} {
    %c0 = arith.constant 0 : index
    %c0_0 = arith.constant 0 : index
    %0 = vector.load %arg6[%c0, %c0_0] : memref<8x128xf32, #tpu.memory_space<vmem>>, vector<1x128xf32>
    %1 = vector.shape_cast %0 : vector<1x128xf32> to vector<128xf32>
    %2 = vector.shape_cast %1 : vector<128xf32> to vector<1x128xf32>
    %c1 = arith.constant 1 : index
    %c0_1 = arith.constant 0 : index
    %3 = vector.load %arg6[%c1, %c0_1] : memref<8x128xf32, #tpu.memory_space<vmem>>, vector<1x128xf32>
    %4 = vector.shape_cast %3 : vector<1x128xf32> to vector<128xf32>
    %5 = vector.shape_cast %4 : vector<128xf32> to vector<1x128xf32>
    %c2 = arith.constant 2 : index
    %c0_2 = arith.constant 0 : index
    %6 = vector.load %arg6[%c2, %c0_2] : memref<8x128xf32, #tpu.memory_space<vmem>>, vector<1x128xf32>
    %7 = vector.shape_cast %6 : vector<1x128xf32> to vector<128xf32>
    %8 = vector.shape_cast %7 : vector<128xf32> to vector<1x128xf32>
    %c3 = arith.constant 3 : index
    %c0_3 = arith.constant 0 : index
    %9 = vector.load %arg6[%c3, %c0_3] : memref<8x128xf32, #tpu.memory_space<vmem>>, vector<1x128xf32>
    %10 = vector.shape_cast %9 : vector<1x128xf32> to vector<128xf32>
    %11 = vector.shape_cast %10 : vector<128xf32> to vector<1x128xf32>
    %c4 = arith.constant 4 : index
    %c0_4 = arith.constant 0 : index
    %12 = vector.load %arg6[%c4, %c0_4] : memref<8x128xf32, #tpu.memory_space<vmem>>, vector<1x128xf32>
    %13 = vector.shape_cast %12 : vector<1x128xf32> to vector<128xf32>
    %14 = vector.shape_cast %13 : vector<128xf32> to vector<1x128xf32>
    %c5 = arith.constant 5 : index
    %c0_5 = arith.constant 0 : index
    %15 = vector.load %arg6[%c5, %c0_5] : memref<8x128xf32, #tpu.memory_space<vmem>>, vector<1x128xf32>
    %16 = vector.shape_cast %15 : vector<1x128xf32> to vector<128xf32>
    %17 = vector.shape_cast %16 : vector<128xf32> to vector<1x128xf32>
    %c6 = arith.constant 6 : index
    %c0_6 = arith.constant 0 : index
    %18 = vector.load %arg6[%c6, %c0_6] : memref<8x128xf32, #tpu.memory_space<vmem>>, vector<1x128xf32>
    %19 = vector.shape_cast %18 : vector<1x128xf32> to vector<128xf32>
    %20 = vector.shape_cast %19 : vector<128xf32> to vector<1x128xf32>
    %c7 = arith.constant 7 : index
    %c0_7 = arith.constant 0 : index
    %21 = vector.load %arg6[%c7, %c0_7] : memref<8x128xf32, #tpu.memory_space<vmem>>, vector<1x128xf32>
    %22 = vector.shape_cast %21 : vector<1x128xf32> to vector<128xf32>
    %23 = vector.shape_cast %22 : vector<128xf32> to vector<1x128xf32>
    %c0_8 = arith.constant 0 : index
    %c0_9 = arith.constant 0 : index
    %24 = vector.load %arg1[%c0_8, %c0_9] : memref<512x128xbf16, #tpu.memory_space<vmem>>, vector<512x128xbf16>
    %c0_10 = arith.constant 0 : index
    %c0_11 = arith.constant 0 : index
    %25 = vector.load %arg3[%c0_10, %c0_11] : memref<128x128xbf16, #tpu.memory_space<vmem>>, vector<128x128xbf16>
    %cst = arith.constant dense<0.000000e+00> : vector<512x128xf32>
    %26 = tpu.matmul %24, %25, %cst {dimension_numbers = #tpu.dot_dimension_numbers<[1], [0], [0], [1], [0, 0, 1, 1], [], []>} : vector<512x128xbf16>, vector<128x128xbf16>, vector<512x128xf32> -> vector<512x128xf32>
    %c0_12 = arith.constant 0 : index
    %c0_13 = arith.constant 0 : index
    %27 = vector.load %arg2[%c0_12, %c0_13] : memref<512x128xf32, #tpu.memory_space<vmem>>, vector<512x128xf32>
    %28 = arith.addf %26, %27 : vector<512x128xf32>
    %cst_14 = arith.constant 0.000000e+00 : f32
    %29 = vector.broadcast %cst_14 : f32 to vector<512x128xf32>
    %30 = arith.maximumf %28, %29 : vector<512x128xf32>
    %31 = arith.truncf %30 : vector<512x128xf32> to vector<512x128xbf16>
    %c0_15 = arith.constant 0 : index
    %c0_16 = arith.constant 0 : index
    %32 = vector.load %arg4[%c0_15, %c0_16] : memref<128x128xbf16, #tpu.memory_space<vmem>>, vector<128x128xbf16>
    %cst_17 = arith.constant dense<0.000000e+00> : vector<512x128xf32>
    %33 = tpu.matmul %31, %32, %cst_17 {dimension_numbers = #tpu.dot_dimension_numbers<[1], [0], [0], [1], [0, 0, 1, 1], [], []>} : vector<512x128xbf16>, vector<128x128xbf16>, vector<512x128xf32> -> vector<512x128xf32>
    %34 = vector.broadcast %2 : vector<1x128xf32> to vector<512x128xf32>
    %35 = arith.addf %33, %34 : vector<512x128xf32>
    %cst_18 = arith.constant 0.000000e+00 : f32
    %36 = vector.broadcast %cst_18 : f32 to vector<512x128xf32>
    %37 = arith.maximumf %35, %36 : vector<512x128xf32>
    %38 = vector.broadcast %5 : vector<1x128xf32> to vector<512x128xf32>
    %39 = arith.mulf %37, %38 : vector<512x128xf32>
    %40 = vector.broadcast %8 : vector<1x128xf32> to vector<512x128xf32>
    %41 = arith.addf %39, %40 : vector<512x128xf32>
    %42 = arith.truncf %41 : vector<512x128xf32> to vector<512x128xbf16>
    %c0_19 = arith.constant 0 : index
    %c0_20 = arith.constant 0 : index
    %43 = vector.load %arg5[%c0_19, %c0_20] : memref<128x128xbf16, #tpu.memory_space<vmem>>, vector<128x128xbf16>
    %cst_21 = arith.constant dense<0.000000e+00> : vector<512x128xf32>
    %44 = tpu.matmul %42, %43, %cst_21 {dimension_numbers = #tpu.dot_dimension_numbers<[1], [0], [0], [1], [0, 0, 1, 1], [], []>} : vector<512x128xbf16>, vector<128x128xbf16>, vector<512x128xf32> -> vector<512x128xf32>
    %45 = vector.broadcast %11 : vector<1x128xf32> to vector<512x128xf32>
    %46 = arith.addf %44, %45 : vector<512x128xf32>
    %cst_22 = arith.constant 0.000000e+00 : f32
    %47 = vector.broadcast %cst_22 : f32 to vector<512x128xf32>
    %48 = arith.maximumf %46, %47 : vector<512x128xf32>
    %49 = vector.broadcast %14 : vector<1x128xf32> to vector<512x128xf32>
    %50 = arith.mulf %48, %49 : vector<512x128xf32>
    %51 = vector.broadcast %17 : vector<1x128xf32> to vector<512x128xf32>
    %52 = arith.addf %50, %51 : vector<512x128xf32>
    %53 = vector.broadcast %20 : vector<1x128xf32> to vector<512x128xf32>
    %54 = arith.mulf %52, %53 : vector<512x128xf32>
    %55 = vector.broadcast %23 : vector<1x128xf32> to vector<512x128xf32>
    %56 = arith.addf %54, %55 : vector<512x128xf32>
    %57 = tpu.transpose %56, [1, 0] : vector<512x128xf32> -> vector<128x512xf32>
    %cst_23 = arith.constant dense<0.000000e+00> : vector<512xf32>
    %58 = vector.multi_reduction <add>, %57, %cst_23 [0] : vector<128x512xf32> to vector<512xf32>
    %59 = vector.shape_cast %58 : vector<512xf32> to vector<1x512xf32>
    %60 = vector.shape_cast %59 : vector<1x512xf32> to vector<1x1x512xf32>
    %c0_24 = arith.constant 0 : index
    %c0_25 = arith.constant 0 : index
    %c0_26 = arith.constant 0 : index
    %61 = vector.load %arg7[%c0_24, %c0_25, %c0_26] : memref<1x1x512xf32, #tpu.memory_space<vmem>>, vector<1x1x512xf32>
    tpu.vector_store %arg7[%c0_24, %c0_25, %c0_26], %60 {strides = array<i32>} : memref<1x1x512xf32, #tpu.memory_space<vmem>>, vector<1x1x512xf32>,
    return
  }
  func.func @transform_0(%arg0: i32) -> (i32, i32) {
    %c0_i32 = arith.constant 0 : i32
    %c0_i32_0 = arith.constant 0 : i32
    return %arg0, %c0_i32 : i32, i32
  }
  func.func @transform_1(%arg0: i32) -> (i32, i32) {
    %c0_i32 = arith.constant 0 : i32
    %c0_i32_0 = arith.constant 0 : i32
    return %arg0, %c0_i32 : i32, i32
  }
  func.func @transform_2(%arg0: i32) -> (i32, i32) {
    %c0_i32 = arith.constant 0 : i32
    %c0_i32_0 = arith.constant 0 : i32
    %c0_i32_1 = arith.constant 0 : i32
    return %c0_i32, %c0_i32_0 : i32, i32
  }
  func.func @transform_3(%arg0: i32) -> (i32, i32) {
    %c0_i32 = arith.constant 0 : i32
    %c0_i32_0 = arith.constant 0 : i32
    %c0_i32_1 = arith.constant 0 : i32
    return %c0_i32, %c0_i32_0 : i32, i32
  }
  func.func @transform_4(%arg0: i32) -> (i32, i32) {
    %c0_i32 = arith.constant 0 : i32
    %c0_i32_0 = arith.constant 0 : i32
    %c0_i32_1 = arith.constant 0 : i32
    return %c0_i32, %c0_i32_0 : i32, i32
  }
  func.func @transform_5(%arg0: i32) -> (i32, i32) {
    %c0_i32 = arith.constant 0 : i32
    %c0_i32_0 = arith.constant 0 : i32
    %c0_i32_1 = arith.constant 0 : i32
    return %c0_i32, %c0_i32_0 : i32, i32
  }
  func.func @transform_6(%arg0: i32) -> (i32, i32, i32) {
    %c0_i32 = arith.constant 0 : i32
    %c0_i32_0 = arith.constant 0 : i32
    %c0_i32_1 = arith.constant 0 : i32
    return %arg0, %c0_i32, %c0_i32_0 : i32, i32, i32
  }
}

</mosaic_0001>

<llo_original>
// kernel: match_module_forward.1
$region0: #{match_module_forward.1}
  #allocation0 [shape = 'u32[]', space=smem, size = 0x4, offset = 0x4, fixed_abs, tag = 'smem constant byte address 0x4 - core index']
  #allocation1 [shape = 'u32[144,128]{1,0:T(1,128)}', space=vmem, size = 0x12000, scoped, tag = 'internal scratch']
  %s0 = inlined_call_operand.vmem [shape: bf16[512,128], index: 0, kind: input, shape index: {}]
  %s1 = inlined_call_operand.vmem [shape: f32[512,128], index: 1, kind: input, shape index: {}]
  %s2 = inlined_call_operand.vmem [shape: bf16[128,128], index: 2, kind: input, shape index: {}]
  %s3 = inlined_call_operand.vmem [shape: bf16[128,128], index: 3, kind: input, shape index: {}]
  %s4 = inlined_call_operand.vmem [shape: bf16[128,128], index: 4, kind: input, shape index: {}]
  %s5 = inlined_call_operand.vmem [shape: f32[8,128], index: 5, kind: input, shape index: {}]
  %s6 = inlined_call_operand.vmem [shape: f32[1,1,512], index: 6, kind: output, shape index: {}]
  %s7 = sld [smem:[#allocation0]]
  $region34: #{match_module_forward.1} parent=0
    _
  %s9 = ssub.s32 1, %s7
  %s10 = scalar_select 0, %s9, %s7
  // Predicated region
  $region2: #{match_module_forward.1} parent=0 // pred_check
    _
  $region3: #{match_module_forward.1} parent=0 // pred_check_branch
    %12 = sbr.rel (0) target = $region5
  $region4: #{match_module_forward.1} parent=0 // pred_region
    _
  $region5: #{match_module_forward.1} parent=0 // pred_fallthru
    _
  // Predicated region
  $region6: #{match_module_forward.1} parent=0 // pred_check
    _
  $region7: #{match_module_forward.1} parent=0 // pred_check_branch
    %14 = sbr.rel (0) target = $region9
  $region8: #{match_module_forward.1} parent=0 // pred_region
    _
  $region9: #{match_module_forward.1} parent=0 // pred_fallthru
    _
  // Predicated region
  $region10: #{match_module_forward.1} parent=0 // pred_check
    _
  $region11: #{match_module_forward.1} parent=0 // pred_check_branch
    %16 = sbr.rel (0) target = $region13
  $region12: #{match_module_forward.1} parent=0 // pred_region
    _
  $region13: #{match_module_forward.1} parent=0 // pred_fallthru
    _
  // Predicated region
  $region14: #{match_module_forward.1} parent=0 // pred_check
    _
  $region15: #{match_module_forward.1} parent=0 // pred_check_branch
    %18 = sbr.rel (0) target = $region17
  $region16: #{match_module_forward.1} parent=0 // pred_region
    _
  $region17: #{match_module_forward.1} parent=0 // pred_fallthru
    _
  // Predicated region
  $region18: #{match_module_forward.1} parent=0 // pred_check
    _
  $region19: #{match_module_forward.1} parent=0 // pred_check_branch
    %20 = sbr.rel (0) target = $region21
  $region20: #{match_module_forward.1} parent=0 // pred_region
    _
  $region21: #{match_module_forward.1} parent=0 // pred_fallthru
    _
  // Predicated region
  $region22: #{match_module_forward.1} parent=0 // pred_check
    _
  $region23: #{match_module_forward.1} parent=0 // pred_check_branch
    %22 = sbr.rel (0) target = $region25
  $region24: #{match_module_forward.1} parent=0 // pred_region
    _
  $region25: #{match_module_forward.1} parent=0 // pred_fallthru
    _
  %v24 = vld [vmem:[%s5] sm:$0x1]
  %v25 = vld [vmem:[%s5 + $0x1] sm:$0x1]
  %v26 = vld [vmem:[%s5 + $0x2] sm:$0x1]
  %v27 = vld [vmem:[%s5 + $0x3] sm:$0x1]
  %v28 = vld [vmem:[%s5 + $0x4] sm:$0x1]
  %v29 = vld [vmem:[%s5 + $0x5] sm:$0x1]
  %v30 = vld [vmem:[%s5 + $0x6] sm:$0x1]
  %v31 = vld [vmem:[%s5 + $0x7] sm:$0x1]
  %v32 = vld [vmem:[%s0] sm:$0xf]
  %v33 = vld [vmem:[%s0 + $0x4] sm:$0xf]
  %v34 = vld [vmem:[%s0 + $0x8] sm:$0xf]
  %v35 = vld [vmem:[%s0 + $0xc] sm:$0xf]
  %v36 = vld [vmem:[%s0 + $0x10] sm:$0xf]
  %v37 = vld [vmem:[%s0 + $0x14] sm:$0xf]
  %v38 = vld [vmem:[%s0 + $0x18] sm:$0xf]
  %v39 = vld [vmem:[%s0 + $0x1c] sm:$0xf]
  %v40 = vld [vmem:[%s0 + $0x20] sm:$0xf]
  %v41 = vld [vmem:[%s0 + $0x24] sm:$0xf]
  %v42 = vld [vmem:[%s0 + $0x28] sm:$0xf]
  %v43 = vld [vmem:[%s0 + $0x2c] sm:$0xf]
  %v44 = vld [vmem:[%s0 + $0x30] sm:$0xf]
  %v45 = vld [vmem:[%s0 + $0x34] sm:$0xf]
  %v46 = vld [vmem:[%s0 + $0x38] sm:$0xf]
  %v47 = vld [vmem:[%s0 + $0x3c] sm:$0xf]
  %v48 = vld [vmem:[%s0 + $0x40] sm:$0xf]
  %v49 = vld [vmem:[%s0 + $0x44] sm:$0xf]
  %v50 = vld [vmem:[%s0 + $0x48] sm:$0xf]
  %v51 = vld [vmem:[%s0 + $0x4c] sm:$0xf]
  %v52 = vld [vmem:[%s0 + $0x50] sm:$0xf]
  %v53 = vld [vmem:[%s0 + $0x54] sm:$0xf]
  %v54 = vld [vmem:[%s0 + $0x58] sm:$0xf]
  %v55 = vld [vmem:[%s0 + $0x5c] sm:$0xf]
  %v56 = vld [vmem:[%s0 + $0x60] sm:$0xf]
  %v57 = vld [vmem:[%s0 + $0x64] sm:$0xf]
  %v58 = vld [vmem:[%s0 + $0x68] sm:$0xf]
  %v59 = vld [vmem:[%s0 + $0x6c] sm:$0xf]
  %v60 = vld [vmem:[%s0 + $0x70] sm:$0xf]
  %v61 = vld [vmem:[%s0 + $0x74] sm:$0xf]
  %v62 = vld [vmem:[%s0 + $0x78] sm:$0xf]
  %v63 = vld [vmem:[%s0 + $0x7c] sm:$0xf]
  %v64 = vld [vmem:[%s0 + $0x80] sm:$0xf]
  %v65 = vld [vmem:[%s0 + $0x84] sm:$0xf]
  %v66 = vld [vmem:[%s0 + $0x88] sm:$0xf]
  %v67 = vld [vmem:[%s0 + $0x8c] sm:$0xf]
  %v68 = vld [vmem:[%s0 + $0x90] sm:$0xf]
  %v69 = vld [vmem:[%s0 + $0x94] sm:$0xf]
  %v70 = vld [vmem:[%s0 + $0x98] sm:$0xf]
  %v71 = vld [vmem:[%s0 + $0x9c] sm:$0xf]
  %v72 = vld [vmem:[%s0 + $0xa0] sm:$0xf]
  %v73 = vld [vmem:[%s0 + $0xa4] sm:$0xf]
  %v74 = vld [vmem:[%s0 + $0xa8] sm:$0xf]
  %v75 = vld [vmem:[%s0 + $0xac] sm:$0xf]
  %v76 = vld [vmem:[%s0 + $0xb0] sm:$0xf]
  %v77 = vld [vmem:[%s0 + $0xb4] sm:$0xf]
  %v78 = vld [vmem:[%s0 + $0xb8] sm:$0xf]
  %v79 = vld [vmem:[%s0 + $0xbc] sm:$0xf]
  %v80 = vld [vmem:[%s0 + $0xc0] sm:$0xf]
  %v81 = vld [vmem:[%s0 + $0xc4] sm:$0xf]
  %v82 = vld [vmem:[%s0 + $0xc8] sm:$0xf]
  %v83 = vld [vmem:[%s0 + $0xcc] sm:$0xf]
  %v84 = vld [vmem:[%s0 + $0xd0] sm:$0xf]
  %v85 = vld [vmem:[%s0 + $0xd4] sm:$0xf]
  %v86 = vld [vmem:[%s0 + $0xd8] sm:$0xf]
  %v87 = vld [vmem:[%s0 + $0xdc] sm:$0xf]
  %v88 = vld [vmem:[%s0 + $0xe0] sm:$0xf]
  %v89 = vld [vmem:[%s0 + $0xe4] sm:$0xf]
  %v90 = vld [vmem:[%s0 + $0xe8] sm:$0xf]
  %v91 = vld [vmem:[%s0 + $0xec] sm:$0xf]
  %v92 = vld [vmem:[%s0 + $0xf0] sm:$0xf]
  %v93 = vld [vmem:[%s0 + $0xf4] sm:$0xf]
  %v94 = vld [vmem:[%s0 + $0xf8] sm:$0xf]
  %v95 = vld [vmem:[%s0 + $0xfc] sm:$0xf]
  %v96 = vld [vmem:[%s2] sm:$0xf]
  %v97 = vld [vmem:[%s2 + $0x4] sm:$0xf]
  %v98 = vld [vmem:[%s2 + $0x8] sm:$0xf]
  %v99 = vld [vmem:[%s2 + $0xc] sm:$0xf]
  %v100 = vld [vmem:[%s2 + $0x10] sm:$0xf]
  %v101 = vld [vmem:[%s2 + $0x14] sm:$0xf]
  %v102 = vld [vmem:[%s2 + $0x18] sm:$0xf]
  %v103 = vld [vmem:[%s2 + $0x1c] sm:$0xf]
  %v104 = vld [vmem:[%s2 + $0x20] sm:$0xf]
  %v105 = vld [vmem:[%s2 + $0x24] sm:$0xf]
  %v106 = vld [vmem:[%s2 + $0x28] sm:$0xf]
  %v107 = vld [vmem:[%s2 + $0x2c] sm:$0xf]
  %v108 = vld [vmem:[%s2 + $0x30] sm:$0xf]
  %v109 = vld [vmem:[%s2 + $0x34] sm:$0xf]
  %v110 = vld [vmem:[%s2 + $0x38] sm:$0xf]
  %v111 = vld [vmem:[%s2 + $0x3c] sm:$0xf]
  %v112 = vld [vmem:[%s1] sm:$0xff]
  %v113 = vld [vmem:[%s1 + $0x8] sm:$0xff]
  %v114 = vld [vmem:[%s1 + $0x10] sm:$0xff]
  %v115 = vld [vmem:[%s1 + $0x18] sm:$0xff]
  %v116 = vld [vmem:[%s1 + $0x20] sm:$0xff]
  %v117 = vld [vmem:[%s1 + $0x28] sm:$0xff]
  %v118 = vld [vmem:[%s1 + $0x30] sm:$0xff]
  %v119 = vld [vmem:[%s1 + $0x38] sm:$0xff]
  %v120 = vld [vmem:[%s1 + $0x40] sm:$0xff]
  %v121 = vld [vmem:[%s1 + $0x48] sm:$0xff]
  %v122 = vld [vmem:[%s1 + $0x50] sm:$0xff]
  %v123 = vld [vmem:[%s1 + $0x58] sm:$0xff]
  %v124 = vld [vmem:[%s1 + $0x60] sm:$0xff]
  %v125 = vld [vmem:[%s1 + $0x68] sm:$0xff]
  %v126 = vld [vmem:[%s1 + $0x70] sm:$0xff]
  %v127 = vld [vmem:[%s1 + $0x78] sm:$0xff]
  %v128 = vld [vmem:[%s1 + $0x80] sm:$0xff]
  %v129 = vld [vmem:[%s1 + $0x88] sm:$0xff]
  %v130 = vld [vmem:[%s1 + $0x90] sm:$0xff]
  %v131 = vld [vmem:[%s1 + $0x98] sm:$0xff]
  %v132 = vld [vmem:[%s1 + $0xa0] sm:$0xff]
  %v133 = vld [vmem:[%s1 + $0xa8] sm:$0xff]
  %v134 = vld [vmem:[%s1 + $0xb0] sm:$0xff]
  %v135 = vld [vmem:[%s1 + $0xb8] sm:$0xff]
  %v136 = vld [vmem:[%s1 + $0xc0] sm:$0xff]
  %v137 = vld [vmem:[%s1 + $0xc8] sm:$0xff]
  %v138 = vld [vmem:[%s1 + $0xd0] sm:$0xff]
  %v139 = vld [vmem:[%s1 + $0xd8] sm:$0xff]
  %v140 = vld [vmem:[%s1 + $0xe0] sm:$0xff]
  %v141 = vld [vmem:[%s1 + $0xe8] sm:$0xff]
  %v142 = vld [vmem:[%s1 + $0xf0] sm:$0xff]
  %v143 = vld [vmem:[%s1 + $0xf8] sm:$0xff]
  %v144 = vld [vmem:[%s1 + $0x100] sm:$0xff]
  %v145 = vld [vmem:[%s1 + $0x108] sm:$0xff]
  %v146 = vld [vmem:[%s1 + $0x110] sm:$0xff]
  %v147 = vld [vmem:[%s1 + $0x118] sm:$0xff]
  %v148 = vld [vmem:[%s1 + $0x120] sm:$0xff]
  %v149 = vld [vmem:[%s1 + $0x128] sm:$0xff]
  %v150 = vld [vmem:[%s1 + $0x130] sm:$0xff]
  %v151 = vld [vmem:[%s1 + $0x138] sm:$0xff]
  %v152 = vld [vmem:[%s1 + $0x140] sm:$0xff]
  %v153 = vld [vmem:[%s1 + $0x148] sm:$0xff]
  %v154 = vld [vmem:[%s1 + $0x150] sm:$0xff]
  %v155 = vld [vmem:[%s1 + $0x158] sm:$0xff]
  %v156 = vld [vmem:[%s1 + $0x160] sm:$0xff]
  %v157 = vld [vmem:[%s1 + $0x168] sm:$0xff]
  %v158 = vld [vmem:[%s1 + $0x170] sm:$0xff]
  %v159 = vld [vmem:[%s1 + $0x178] sm:$0xff]
  %v160 = vld [vmem:[%s1 + $0x180] sm:$0xff]
  %v161 = vld [vmem:[%s1 + $0x188] sm:$0xff]
  %v162 = vld [vmem:[%s1 + $0x190] sm:$0xff]
  %v163 = vld [vmem:[%s1 + $0x198] sm:$0xff]
  %v164 = vld [vmem:[%s1 + $0x1a0] sm:$0xff]
  %v165 = vld [vmem:[%s1 + $0x1a8] sm:$0xff]
  %v166 = vld [vmem:[%s1 + $0x1b0] sm:$0xff]
  %v167 = vld [vmem:[%s1 + $0x1b8] sm:$0xff]
  %v168 = vld [vmem:[%s1 + $0x1c0] sm:$0xff]
  %v169 = vld [vmem:[%s1 + $0x1c8] sm:$0xff]
  %v170 = vld [vmem:[%s1 + $0x1d0] sm:$0xff]
  %v171 = vld [vmem:[%s1 + $0x1d8] sm:$0xff]
  %v172 = vld [vmem:[%s1 + $0x1e0] sm:$0xff]
  %v173 = vld [vmem:[%s1 + $0x1e8] sm:$0xff]
  %v174 = vld [vmem:[%s1 + $0x1f0] sm:$0xff]
  %v175 = vld [vmem:[%s1 + $0x1f8] sm:$0xff]
  %v240 = vunpack.c.l.b16 %v32
  %v241 = vunpack.c.l.b16 %v33
  %v242 = vunpack.c.l.b16 %v34
  %v243 = vunpack.c.l.b16 %v35
  %v244 = vunpack.c.l.b16 %v36
  %v245 = vunpack.c.l.b16 %v37
  %v246 = vunpack.c.l.b16 %v38
  %v247 = vunpack.c.l.b16 %v39
  %v248 = vunpack.c.l.b16 %v40
  %v249 = vunpack.c.l.b16 %v41
  %v250 = vunpack.c.l.b16 %v42
  %v251 = vunpack.c.l.b16 %v43
  %v252 = vunpack.c.l.b16 %v44
  %v253 = vunpack.c.l.b16 %v45
  %v254 = vunpack.c.l.b16 %v46
  %v255 = vunpack.c.l.b16 %v47
  %v256 = vunpack.c.l.b16 %v48
  %v257 = vunpack.c.l.b16 %v49
  %v258 = vunpack.c.l.b16 %v50
  %v259 = vunpack.c.l.b16 %v51
  %v260 = vunpack.c.l.b16 %v52
  %v261 = vunpack.c.l.b16 %v53
  %v262 = vunpack.c.l.b16 %v54
  %v263 = vunpack.c.l.b16 %v55
  %v264 = vunpack.c.l.b16 %v56
  %v265 = vunpack.c.l.b16 %v57
  %v266 = vunpack.c.l.b16 %v58
  %v267 = vunpack.c.l.b16 %v59
  %v268 = vunpack.c.l.b16 %v60
  %v269 = vunpack.c.l.b16 %v61
  %v270 = vunpack.c.l.b16 %v62
  %v271 = vunpack.c.l.b16 %v63
  %v272 = vunpack.c.l.b16 %v64
  %v273 = vunpack.c.l.b16 %v65
  %v274 = vunpack.c.l.b16 %v66
  %v275 = vunpack.c.l.b16 %v67
  %v276 = vunpack.c.l.b16 %v68
  %v277 = vunpack.c.l.b16 %v69
  %v278 = vunpack.c.l.b16 %v70
  %v279 = vunpack.c.l.b16 %v71
  %v280 = vunpack.c.l.b16 %v72
  %v281 = vunpack.c.l.b16 %v73
  %v282 = vunpack.c.l.b16 %v74
  %v283 = vunpack.c.l.b16 %v75
  %v284 = vunpack.c.l.b16 %v76
  %v285 = vunpack.c.l.b16 %v77
  %v286 = vunpack.c.l.b16 %v78
  %v287 = vunpack.c.l.b16 %v79
  %v288 = vunpack.c.l.b16 %v80
  %v289 = vunpack.c.l.b16 %v81
  %v290 = vunpack.c.l.b16 %v82
  %v291 = vunpack.c.l.b16 %v83
  %v292 = vunpack.c.l.b16 %v84
  %v293 = vunpack.c.l.b16 %v85
  %v294 = vunpack.c.l.b16 %v86
  %v295 = vunpack.c.l.b16 %v87
  %v296 = vunpack.c.l.b16 %v88
  %v297 = vunpack.c.l.b16 %v89
  %v298 = vunpack.c.l.b16 %v90
  %v299 = vunpack.c.l.b16 %v91
  %v300 = vunpack.c.l.b16 %v92
  %v301 = vunpack.c.l.b16 %v93
  %v302 = vunpack.c.l.b16 %v94
  %v303 = vunpack.c.l.b16 %v95
  %v304 = vpack.c.b16 %v241, %v240
  %v305 = vpack.c.b16 %v243, %v242
  %v306 = vpack.c.b16 %v245, %v244
  %v307 = vpack.c.b16 %v247, %v246
  %v308 = vpack.c.b16 %v249, %v248
  %v309 = vpack.c.b16 %v251, %v250
  %v310 = vpack.c.b16 %v253, %v252
  %v311 = vpack.c.b16 %v255, %v254
  %v312 = vpack.c.b16 %v257, %v256
  %v313 = vpack.c.b16 %v259, %v258
  %v314 = vpack.c.b16 %v261, %v260
  %v315 = vpack.c.b16 %v263, %v262
  %v316 = vpack.c.b16 %v265, %v264
  %v317 = vpack.c.b16 %v267, %v266
  %v318 = vpack.c.b16 %v269, %v268
  %v319 = vpack.c.b16 %v271, %v270
  %v320 = vpack.c.b16 %v273, %v272
  %v321 = vpack.c.b16 %v275, %v274
  %v322 = vpack.c.b16 %v277, %v276
  %v323 = vpack.c.b16 %v279, %v278
  %v324 = vpack.c.b16 %v281, %v280
  %v325 = vpack.c.b16 %v283, %v282
  %v326 = vpack.c.b16 %v285, %v284
  %v327 = vpack.c.b16 %v287, %v286
  %v328 = vpack.c.b16 %v289, %v288
  %v329 = vpack.c.b16 %v291, %v290
  %v330 = vpack.c.b16 %v293, %v292
  %v331 = vpack.c.b16 %v295, %v294
  %v332 = vpack.c.b16 %v297, %v296
  %v333 = vpack.c.b16 %v299, %v298
  %v334 = vpack.c.b16 %v301, %v300
  %v335 = vpack.c.b16 %v303, %v302
  %v384 = vunpack.c.l.b16 %v96
  %v385 = vunpack.c.l.b16 %v97
  %v386 = vunpack.c.l.b16 %v98
  %v387 = vunpack.c.l.b16 %v99
  %v388 = vunpack.c.l.b16 %v100
  %v389 = vunpack.c.l.b16 %v101
  %v390 = vunpack.c.l.b16 %v102
  %v391 = vunpack.c.l.b16 %v103
  %v392 = vunpack.c.l.b16 %v104
  %v393 = vunpack.c.l.b16 %v105
  %v394 = vunpack.c.l.b16 %v106
  %v395 = vunpack.c.l.b16 %v107
  %v396 = vunpack.c.l.b16 %v108
  %v397 = vunpack.c.l.b16 %v109
  %v398 = vunpack.c.l.b16 %v110
  %v399 = vunpack.c.l.b16 %v111
  %v400 = vpack.c.b16 %v385, %v384
  %v401 = vpack.c.b16 %v387, %v386
  %v402 = vpack.c.b16 %v389, %v388
  %v403 = vpack.c.b16 %v391, %v390
  %v404 = vpack.c.b16 %v393, %v392
  %v405 = vpack.c.b16 %v395, %v394
  %v406 = vpack.c.b16 %v397, %v396
  %v407 = vpack.c.b16 %v399, %v398
  %416 = vmatprep.subr.bf16.mxu0 0
  %417 = vmatpush1.bf16.msra.mxu0 %v400
  %418 = vmatprep.subr.bf16.mxu0 0
  %419 = vmatpush1.bf16.msra.mxu0 %v401
  %420 = vmatprep.subr.bf16.mxu0 0
  %421 = vmatpush1.bf16.msra.mxu0 %v402
  %422 = vmatprep.subr.bf16.mxu0 0
  %423 = vmatpush1.bf16.msra.mxu0 %v403
  %424 = vmatprep.subr.bf16.mxu0 0
  %425 = vmatpush1.bf16.msra.mxu0 %v404
  %426 = vmatprep.subr.bf16.mxu0 0
  %427 = vmatpush1.bf16.msra.mxu0 %v405
  %428 = vmatprep.subr.bf16.mxu0 0
  %429 = vmatpush1.bf16.msra.mxu0 %v406
  %430 = vmatprep.subr.bf16.mxu0 0
  %431 = vmatpush1.bf16.msra.mxu0 %v407
  %432 = vmatprep.subr.bf16.mxu0 0
  %433 = vmatpush1.bf16.msra.mxu0 0
  %434 = vmatprep.subr.bf16.mxu0 0
  %435 = vmatpush1.bf16.msra.mxu0 0
  %436 = vmatprep.subr.bf16.mxu0 0
  %437 = vmatpush1.bf16.msra.mxu0 0
  %438 = vmatprep.subr.bf16.mxu0 0
  %439 = vmatpush1.bf16.msra.mxu0 0
  %440 = vmatprep.subr.bf16.mxu0 0
  %441 = vmatpush1.bf16.msra.mxu0 0
  %442 = vmatprep.subr.bf16.mxu0 0
  %443 = vmatpush1.bf16.msra.mxu0 0
  %444 = vmatprep.subr.bf16.mxu0 0
  %445 = vmatpush1.bf16.msra.mxu0 0
  %446 = vmatprep.subr.bf16.mxu0 0
  %447 = vmatpush1.bf16.msra.mxu0 0
  %448 = vmatprep.mubr.bf16.mxu0 0
  %449 = vmatmul.mubr.bf16.gmra.mrb[0].mxu0 %v304
  %v450 = vpop.f32.mrb[0].mxu0
  %v451 = vadd.f32 %v112, %v450
  %v452 = vpop.f32.mrb[0].mxu0
  %v453 = vpop.f32.mrb[0].mxu0
  %v454 = vadd.f32 %v113, %v453
  %v455 = vpop.f32.mrb[0].mxu0
  %456 = vmatprep.mubr.bf16.mxu0 0
  %457 = vmatmul.mubr.bf16.gmra.mrb[0].mxu0 %v305
  %v458 = vpop.f32.mrb[0].mxu0
  %v459 = vadd.f32 %v114, %v458
  %v460 = vpop.f32.mrb[0].mxu0
  %v461 = vpop.f32.mrb[0].mxu0
  %v462 = vadd.f32 %v115, %v461
  %v463 = vpop.f32.mrb[0].mxu0
  %464 = vmatprep.mubr.bf16.mxu0 0
  %465 = vmatmul.mubr.bf16.gmra.mrb[0].mxu0 %v306
  %v466 = vpop.f32.mrb[0].mxu0
  %v467 = vadd.f32 %v116, %v466
  %v468 = vpop.f32.mrb[0].mxu0
  %v469 = vpop.f32.mrb[0].mxu0
  %v470 = vadd.f32 %v117, %v469
  %v471 = vpop.f32.mrb[0].mxu0
  %472 = vmatprep.mubr.bf16.mxu0 0
  %473 = vmatmul.mubr.bf16.gmra.mrb[0].mxu0 %v307
  %v474 = vpop.f32.mrb[0].mxu0
  %v475 = vadd.f32 %v118, %v474
  %v476 = vpop.f32.mrb[0].mxu0
  %v477 = vpop.f32.mrb[0].mxu0
  %v478 = vadd.f32 %v119, %v477
  %v479 = vpop.f32.mrb[0].mxu0
  %480 = vmatprep.mubr.bf16.mxu0 0
  %481 = vmatmul.mubr.bf16.gmra.mrb[0].mxu0 %v308
  %v482 = vpop.f32.mrb[0].mxu0
  %v483 = vadd.f32 %v120, %v482
  %v484 = vpop.f32.mrb[0].mxu0
  %v485 = vpop.f32.mrb[0].mxu0
  %v486 = vadd.f32 %v121, %v485
  %v487 = vpop.f32.mrb[0].mxu0
  %488 = vmatprep.mubr.bf16.mxu0 0
  %489 = vmatmul.mubr.bf16.gmra.mrb[0].mxu0 %v309
  %v490 = vpop.f32.mrb[0].mxu0
  %v491 = vadd.f32 %v122, %v490
  %v492 = vpop.f32.mrb[0].mxu0
  %v493 = vpop.f32.mrb[0].mxu0
  %v494 = vadd.f32 %v123, %v493
  %v495 = vpop.f32.mrb[0].mxu0
  %496 = vmatprep.mubr.bf16.mxu0 0
  %497 = vmatmul.mubr.bf16.gmra.mrb[0].mxu0 %v310
  %v498 = vpop.f32.mrb[0].mxu0
  %v499 = vadd.f32 %v124, %v498
  %v500 = vpop.f32.mrb[0].mxu0
  %v501 = vpop.f32.mrb[0].mxu0
  %v502 = vadd.f32 %v125, %v501
  %v503 = vpop.f32.mrb[0].mxu0
  %504 = vmatprep.mubr.bf16.mxu0 0
  %505 = vmatmul.mubr.bf16.gmra.mrb[0].mxu0 %v311
  %v506 = vpop.f32.mrb[0].mxu0
  %v507 = vadd.f32 %v126, %v506
  %v508 = vpop.f32.mrb[0].mxu0
  %v509 = vpop.f32.mrb[0].mxu0
  %v510 = vadd.f32 %v127, %v509
  %v511 = vpop.f32.mrb[0].mxu0
  %512 = vmatprep.mubr.bf16.mxu0 0
  %513 = vmatmul.mubr.bf16.gmra.mrb[0].mxu0 %v312
  %v514 = vpop.f32.mrb[0].mxu0
  %v515 = vadd.f32 %v128, %v514
  %v516 = vpop.f32.mrb[0].mxu0
  %v517 = vpop.f32.mrb[0].mxu0
  %v518 = vadd.f32 %v129, %v517
  %v519 = vpop.f32.mrb[0].mxu0
  %520 = vmatprep.mubr.bf16.mxu0 0
  %521 = vmatmul.mubr.bf16.gmra.mrb[0].mxu0 %v313
  %v522 = vpop.f32.mrb[0].mxu0
  %v523 = vadd.f32 %v130, %v522
  %v524 = vpop.f32.mrb[0].mxu0
  %v525 = vpop.f32.mrb[0].mxu0
  %v526 = vadd.f32 %v131, %v525
  %v527 = vpop.f32.mrb[0].mxu0
  %528 = vmatprep.mubr.bf16.mxu0 0
  %529 = vmatmul.mubr.bf16.gmra.mrb[0].mxu0 %v314
  %v530 = vpop.f32.mrb[0].mxu0
  %v531 = vadd.f32 %v132, %v530
  %v532 = vpop.f32.mrb[0].mxu0
  %v533 = vpop.f32.mrb[0].mxu0
  %v534 = vadd.f32 %v133, %v533
  %v535 = vpop.f32.mrb[0].mxu0
  %536 = vmatprep.mubr.bf16.mxu0 0
  %537 = vmatmul.mubr.bf16.gmra.mrb[0].mxu0 %v315
  %v538 = vpop.f32.mrb[0].mxu0
  %v539 = vadd.f32 %v134, %v538
  %v540 = vpop.f32.mrb[0].mxu0
  %v541 = vpop.f32.mrb[0].mxu0
  %v542 = vadd.f32 %v135, %v541
  %v543 = vpop.f32.mrb[0].mxu0
  %544 = vmatprep.mubr.bf16.mxu0 0
  %545 = vmatmul.mubr.bf16.gmra.mrb[0].mxu0 %v316
  %v546 = vpop.f32.mrb[0].mxu0
  %v547 = vadd.f32 %v136, %v546
  %v548 = vpop.f32.mrb[0].mxu0
  %v549 = vpop.f32.mrb[0].mxu0
  %v550 = vadd.f32 %v137, %v549
  %v551 = vpop.f32.mrb[0].mxu0
  %552 = vmatprep.mubr.bf16.mxu0 0
  %553 = vmatmul.mubr.bf16.gmra.mrb[0].mxu0 %v317
  %v554 = vpop.f32.mrb[0].mxu0
  %v555 = vadd.f32 %v138, %v554
  %v556 = vpop.f32.mrb[0].mxu0
  %v557 = vpop.f32.mrb[0].mxu0
  %v558 = vadd.f32 %v139, %v557
  %v559 = vpop.f32.mrb[0].mxu0
  %560 = vmatprep.mubr.bf16.mxu0 0
  %561 = vmatmul.mubr.bf16.gmra.mrb[0].mxu0 %v318
  %v562 = vpop.f32.mrb[0].mxu0
  %v563 = vadd.f32 %v140, %v562
  %v564 = vpop.f32.mrb[0].mxu0
  %v565 = vpop.f32.mrb[0].mxu0
  %v566 = vadd.f32 %v141, %v565
  %v567 = vpop.f32.mrb[0].mxu0
  %568 = vmatprep.mubr.bf16.mxu0 0
  %569 = vmatmul.mubr.bf16.gmra.mrb[0].mxu0 %v319
  %v570 = vpop.f32.mrb[0].mxu0
  %v571 = vadd.f32 %v142, %v570
  %v572 = vpop.f32.mrb[0].mxu0
  %v573 = vpop.f32.mrb[0].mxu0
  %v574 = vadd.f32 %v143, %v573
  %v575 = vpop.f32.mrb[0].mxu0
  %576 = vmatprep.mubr.bf16.mxu0 0
  %577 = vmatmul.mubr.bf16.gmra.mrb[0].mxu0 %v320
  %v578 = vpop.f32.mrb[0].mxu0
  %v579 = vadd.f32 %v144, %v578
  %v580 = vpop.f32.mrb[0].mxu0
  %v581 = vpop.f32.mrb[0].mxu0
  %v582 = vadd.f32 %v145, %v581
  %v583 = vpop.f32.mrb[0].mxu0
  %584 = vmatprep.mubr.bf16.mxu0 0
  %585 = vmatmul.mubr.bf16.gmra.mrb[0].mxu0 %v321
  %v586 = vpop.f32.mrb[0].mxu0
  %v587 = vadd.f32 %v146, %v586
  %v588 = vpop.f32.mrb[0].mxu0
  %v589 = vpop.f32.mrb[0].mxu0
  %v590 = vadd.f32 %v147, %v589
  %v591 = vpop.f32.mrb[0].mxu0
  %592 = vmatprep.mubr.bf16.mxu0 0
  %593 = vmatmul.mubr.bf16.gmra.mrb[0].mxu0 %v322
  %v594 = vpop.f32.mrb[0].mxu0
  %v595 = vadd.f32 %v148, %v594
  %v596 = vpop.f32.mrb[0].mxu0
  %v597 = vpop.f32.mrb[0].mxu0
  %v598 = vadd.f32 %v149, %v597
  %v599 = vpop.f32.mrb[0].mxu0
  %600 = vmatprep.mubr.bf16.mxu0 0
  %601 = vmatmul.mubr.bf16.gmra.mrb[0].mxu0 %v323
  %v602 = vpop.f32.mrb[0].mxu0
  %v603 = vadd.f32 %v150, %v602
  %v604 = vpop.f32.mrb[0].mxu0
  %v605 = vpop.f32.mrb[0].mxu0
  %v606 = vadd.f32 %v151, %v605
  %v607 = vpop.f32.mrb[0].mxu0
  %608 = vmatprep.mubr.bf16.mxu0 0
  %609 = vmatmul.mubr.bf16.gmra.mrb[0].mxu0 %v324
  %v610 = vpop.f32.mrb[0].mxu0
  %v611 = vadd.f32 %v152, %v610
  %v612 = vpop.f32.mrb[0].mxu0
  %v613 = vpop.f32.mrb[0].mxu0
  %v614 = vadd.f32 %v153, %v613
  %v615 = vpop.f32.mrb[0].mxu0
  %616 = vmatprep.mubr.bf16.mxu0 0
  %617 = vmatmul.mubr.bf16.gmra.mrb[0].mxu0 %v325
  %v618 = vpop.f32.mrb[0].mxu0
  %v619 = vadd.f32 %v154, %v618
  %v620 = vpop.f32.mrb[0].mxu0
  %v621 = vpop.f32.mrb[0].mxu0
  %v622 = vadd.f32 %v155, %v621
  %v623 = vpop.f32.mrb[0].mxu0
  %624 = vmatprep.mubr.bf16.mxu0 0
  %625 = vmatmul.mubr.bf16.gmra.mrb[0].mxu0 %v326
  %v626 = vpop.f32.mrb[0].mxu0
  %v627 = vadd.f32 %v156, %v626
  %v628 = vpop.f32.mrb[0].mxu0
  %v629 = vpop.f32.mrb[0].mxu0
  %v630 = vadd.f32 %v157, %v629
  %v631 = vpop.f32.mrb[0].mxu0
  %632 = vmatprep.mubr.bf16.mxu0 0
  %633 = vmatmul.mubr.bf16.gmra.mrb[0].mxu0 %v327
  %v634 = vpop.f32.mrb[0].mxu0
  %v635 = vadd.f32 %v158, %v634
  %v636 = vpop.f32.mrb[0].mxu0
  %v637 = vpop.f32.mrb[0].mxu0
  %v638 = vadd.f32 %v159, %v637
  %v639 = vpop.f32.mrb[0].mxu0
  %640 = vmatprep.mubr.bf16.mxu0 0
  %641 = vmatmul.mubr.bf16.gmra.mrb[0].mxu0 %v328
  %v642 = vpop.f32.mrb[0].mxu0
  %v643 = vadd.f32 %v160, %v642
  %v644 = vpop.f32.mrb[0].mxu0
  %v645 = vpop.f32.mrb[0].mxu0
  %v646 = vadd.f32 %v161, %v645
  %v647 = vpop.f32.mrb[0].mxu0
  %648 = vmatprep.mubr.bf16.mxu0 0
  %649 = vmatmul.mubr.bf16.gmra.mrb[0].mxu0 %v329
  %v650 = vpop.f32.mrb[0].mxu0
  %v651 = vadd.f32 %v162, %v650
  %v652 = vpop.f32.mrb[0].mxu0
  %v653 = vpop.f32.mrb[0].mxu0
  %v654 = vadd.f32 %v163, %v653
  %v655 = vpop.f32.mrb[0].mxu0
  %656 = vmatprep.mubr.bf16.mxu0 0
  %657 = vmatmul.mubr.bf16.gmra.mrb[0].mxu0 %v330
  %v658 = vpop.f32.mrb[0].mxu0
  %v659 = vadd.f32 %v164, %v658
  %v660 = vpop.f32.mrb[0].mxu0
  %v661 = vpop.f32.mrb[0].mxu0
  %v662 = vadd.f32 %v165, %v661
  %v663 = vpop.f32.mrb[0].mxu0
  %664 = vmatprep.mubr.bf16.mxu0 0
  %665 = vmatmul.mubr.bf16.gmra.mrb[0].mxu0 %v331
  %v666 = vpop.f32.mrb[0].mxu0
  %v667 = vadd.f32 %v166, %v666
  %v668 = vpop.f32.mrb[0].mxu0
  %v669 = vpop.f32.mrb[0].mxu0
  %v670 = vadd.f32 %v167, %v669
  %v671 = vpop.f32.mrb[0].mxu0
  %672 = vmatprep.mubr.bf16.mxu0 0
  %673 = vmatmul.mubr.bf16.gmra.mrb[0].mxu0 %v332
  %v674 = vpop.f32.mrb[0].mxu0
  %v675 = vadd.f32 %v168, %v674
  %v676 = vpop.f32.mrb[0].mxu0
  %v677 = vpop.f32.mrb[0].mxu0
  %v678 = vadd.f32 %v169, %v677
  %v679 = vpop.f32.mrb[0].mxu0
  %680 = vmatprep.mubr.bf16.mxu0 0
  %681 = vmatmul.mubr.bf16.gmra.mrb[0].mxu0 %v333
  %v682 = vpop.f32.mrb[0].mxu0
  %v683 = vadd.f32 %v170, %v682
  %v684 = vpop.f32.mrb[0].mxu0
  %v685 = vpop.f32.mrb[0].mxu0
  %v686 = vadd.f32 %v171, %v685
  %v687 = vpop.f32.mrb[0].mxu0
  %688 = vmatprep.mubr.bf16.mxu0 0
  %689 = vmatmul.mubr.bf16.gmra.mrb[0].mxu0 %v334
  %v690 = vpop.f32.mrb[0].mxu0
  %v691 = vadd.f32 %v172, %v690
  %v692 = vpop.f32.mrb[0].mxu0
  %v693 = vpop.f32.mrb[0].mxu0
  %v694 = vadd.f32 %v173, %v693
  %v695 = vpop.f32.mrb[0].mxu0
  %696 = vmatprep.mubr.bf16.mxu0 0
  %697 = vmatmul.mubr.bf16.gmra.mrb[0].mxu0 %v335
  %v698 = vpop.f32.mrb[0].mxu0
  %v699 = vadd.f32 %v174, %v698
  %v700 = vpop.f32.mrb[0].mxu0
  %v701 = vpop.f32.mrb[0].mxu0
  %v702 = vadd.f32 %v175, %v701
  %v703 = vpop.f32.mrb[0].mxu0
  %704 = vdwg.mxu0
  %v705 = vmax.f32 %v451, 0.0
  %v706 = vmax.f32 %v454, 0.0
  %v707 = vmax.f32 %v459, 0.0
  %v708 = vmax.f32 %v462, 0.0
  %v709 = vmax.f32 %v467, 0.0
  %v710 = vmax.f32 %v470, 0.0
  %v711 = vmax.f32 %v475, 0.0
  %v712 = vmax.f32 %v478, 0.0
  %v713 = vmax.f32 %v483, 0.0
  %v714 = vmax.f32 %v486, 0.0
  %v715 = vmax.f32 %v491, 0.0
  %v716 = vmax.f32 %v494, 0.0
  %v717 = vmax.f32 %v499, 0.0
  %v718 = vmax.f32 %v502, 0.0
  %v719 = vmax.f32 %v507, 0.0
  %v720 = vmax.f32 %v510, 0.0
  %v721 = vmax.f32 %v515, 0.0
  %v722 = vmax.f32 %v518, 0.0
  %v723 = vmax.f32 %v523, 0.0
  %v724 = vmax.f32 %v526, 0.0
  %v725 = vmax.f32 %v531, 0.0
  %v726 = vmax.f32 %v534, 0.0
  %v727 = vmax.f32 %v539, 0.0
  %v728 = vmax.f32 %v542, 0.0
  %v729 = vmax.f32 %v547, 0.0
  %v730 = vmax.f32 %v550, 0.0
  %v731 = vmax.f32 %v555, 0.0
  %v732 = vmax.f32 %v558, 0.0
  %v733 = vmax.f32 %v563, 0.0
  %v734 = vmax.f32 %v566, 0.0
  %v735 = vmax.f32 %v571, 0.0
  %v736 = vmax.f32 %v574, 0.0
  %v737 = vmax.f32 %v579, 0.0
  %v738 = vmax.f32 %v582, 0.0
  %v739 = vmax.f32 %v587, 0.0
  %v740 = vmax.f32 %v590, 0.0
  %v741 = vmax.f32 %v595, 0.0
  %v742 = vmax.f32 %v598, 0.0
  %v743 = vmax.f32 %v603, 0.0
  %v744 = vmax.f32 %v606, 0.0
  %v745 = vmax.f32 %v611, 0.0
  %v746 = vmax.f32 %v614, 0.0
  %v747 = vmax.f32 %v619, 0.0
  %v748 = vmax.f32 %v622, 0.0
  %v749 = vmax.f32 %v627, 0.0
  %v750 = vmax.f32 %v630, 0.0
  %v751 = vmax.f32 %v635, 0.0
  %v752 = vmax.f32 %v638, 0.0
  %v753 = vmax.f32 %v643, 0.0
  %v754 = vmax.f32 %v646, 0.0
  %v755 = vmax.f32 %v651, 0.0
  %v756 = vmax.f32 %v654, 0.0
  %v757 = vmax.f32 %v659, 0.0
  %v758 = vmax.f32 %v662, 0.0
  %v759 = vmax.f32 %v667, 0.0
  %v760 = vmax.f32 %v670, 0.0
  %v761 = vmax.f32 %v675, 0.0
  %v762 = vmax.f32 %v678, 0.0
  %v763 = vmax.f32 %v683, 0.0
  %v764 = vmax.f32 %v686, 0.0
  %v765 = vmax.f32 %v691, 0.0
  %v766 = vmax.f32 %v694, 0.0
  %v767 = vmax.f32 %v699, 0.0
  %v768 = vmax.f32 %v702, 0.0
  %v769 = vpack.c.bf16 %v706, %v705
  %v770 = vpack.c.bf16 %v708, %v707
  %v771 = vpack.c.bf16 %v710, %v709
  %v772 = vpack.c.bf16 %v712, %v711
  %v773 = vpack.c.bf16 %v714, %v713
  %v774 = vpack.c.bf16 %v716, %v715
  %v775 = vpack.c.bf16 %v718, %v717
  %v776 = vpack.c.bf16 %v720, %v719
  %v777 = vpack.c.bf16 %v722, %v721
  %v778 = vpack.c.bf16 %v724, %v723
  %v779 = vpack.c.bf16 %v726, %v725
  %v780 = vpack.c.bf16 %v728, %v727
  %v781 = vpack.c.bf16 %v730, %v729
  %v782 = vpack.c.bf16 %v732, %v731
  %v783 = vpack.c.bf16 %v734, %v733
  %v784 = vpack.c.bf16 %v736, %v735
  %v785 = vpack.c.bf16 %v738, %v737
  %v786 = vpack.c.bf16 %v740, %v739
  %v787 = vpack.c.bf16 %v742, %v741
  %v788 = vpack.c.bf16 %v744, %v743
  %v789 = vpack.c.bf16 %v746, %v745
  %v790 = vpack.c.bf16 %v748, %v747
  %v791 = vpack.c.bf16 %v750, %v749
  %v792 = vpack.c.bf16 %v752, %v751
  %v793 = vpack.c.bf16 %v754, %v753
  %v794 = vpack.c.bf16 %v756, %v755
  %v795 = vpack.c.bf16 %v758, %v757
  %v796 = vpack.c.bf16 %v760, %v759
  %v797 = vpack.c.bf16 %v762, %v761
  %v798 = vpack.c.bf16 %v764, %v763
  %v799 = vpack.c.bf16 %v766, %v765
  %v800 = vpack.c.bf16 %v768, %v767
  %v801 = vld [vmem:[%s3] sm:$0xf]
  %v802 = vld [vmem:[%s3 + $0x4] sm:$0xf]
  %v803 = vld [vmem:[%s3 + $0x8] sm:$0xf]
  %v804 = vld [vmem:[%s3 + $0xc] sm:$0xf]
  %v805 = vld [vmem:[%s3 + $0x10] sm:$0xf]
  %v806 = vld [vmem:[%s3 + $0x14] sm:$0xf]
  %v807 = vld [vmem:[%s3 + $0x18] sm:$0xf]
  %v808 = vld [vmem:[%s3 + $0x1c] sm:$0xf]
  %v809 = vld [vmem:[%s3 + $0x20] sm:$0xf]
  %v810 = vld [vmem:[%s3 + $0x24] sm:$0xf]
  %v811 = vld [vmem:[%s3 + $0x28] sm:$0xf]
  %v812 = vld [vmem:[%s3 + $0x2c] sm:$0xf]
  %v813 = vld [vmem:[%s3 + $0x30] sm:$0xf]
  %v814 = vld [vmem:[%s3 + $0x34] sm:$0xf]
  %v815 = vld [vmem:[%s3 + $0x38] sm:$0xf]
  %v816 = vld [vmem:[%s3 + $0x3c] sm:$0xf]
  %v817 = vlaneseq
  %v818 = vshrl.u32 %v817, 7
  %v819 = vsub.s32 0, %v818
  %v820 = vrot.slane %v24, %v819
  %v837 = vunpack.c.l.b16 %v801
  %v838 = vunpack.c.l.b16 %v802
  %v839 = vunpack.c.l.b16 %v803
  %v840 = vunpack.c.l.b16 %v804
  %v841 = vunpack.c.l.b16 %v805
  %v842 = vunpack.c.l.b16 %v806
  %v843 = vunpack.c.l.b16 %v807
  %v844 = vunpack.c.l.b16 %v808
  %v845 = vunpack.c.l.b16 %v809
  %v846 = vunpack.c.l.b16 %v810
  %v847 = vunpack.c.l.b16 %v811
  %v848 = vunpack.c.l.b16 %v812
  %v849 = vunpack.c.l.b16 %v813
  %v850 = vunpack.c.l.b16 %v814
  %v851 = vunpack.c.l.b16 %v815
  %v852 = vunpack.c.l.b16 %v816
  %v853 = vpack.c.b16 %v838, %v837
  %v854 = vpack.c.b16 %v840, %v839
  %v855 = vpack.c.b16 %v842, %v841
  %v856 = vpack.c.b16 %v844, %v843
  %v857 = vpack.c.b16 %v846, %v845
  %v858 = vpack.c.b16 %v848, %v847
  %v859 = vpack.c.b16 %v850, %v849
  %v860 = vpack.c.b16 %v852, %v851
  %869 = vmatprep.subr.bf16.mxu0 0
  %870 = vmatpush1.bf16.msra.mxu0 %v853
  %871 = vmatprep.subr.bf16.mxu0 0
  %872 = vmatpush1.bf16.msra.mxu0 %v854
  %873 = vmatprep.subr.bf16.mxu0 0
  %874 = vmatpush1.bf16.msra.mxu0 %v855
  %875 = vmatprep.subr.bf16.mxu0 0
  %876 = vmatpush1.bf16.msra.mxu0 %v856
  %877 = vmatprep.subr.bf16.mxu0 0
  %878 = vmatpush1.bf16.msra.mxu0 %v857
  %879 = vmatprep.subr.bf16.mxu0 0
  %880 = vmatpush1.bf16.msra.mxu0 %v858
  %881 = vmatprep.subr.bf16.mxu0 0
  %882 = vmatpush1.bf16.msra.mxu0 %v859
  %883 = vmatprep.subr.bf16.mxu0 0
  %884 = vmatpush1.bf16.msra.mxu0 %v860
  %885 = vmatprep.subr.bf16.mxu0 0
  %886 = vmatpush1.bf16.msra.mxu0 0
  %887 = vmatprep.subr.bf16.mxu0 0
  %888 = vmatpush1.bf16.msra.mxu0 0
  %889 = vmatprep.subr.bf16.mxu0 0
  %890 = vmatpush1.bf16.msra.mxu0 0
  %891 = vmatprep.subr.bf16.mxu0 0
  %892 = vmatpush1.bf16.msra.mxu0 0
  %893 = vmatprep.subr.bf16.mxu0 0
  %894 = vmatpush1.bf16.msra.mxu0 0
  %895 = vmatprep.subr.bf16.mxu0 0
  %896 = vmatpush1.bf16.msra.mxu0 0
  %897 = vmatprep.subr.bf16.mxu0 0
  %898 = vmatpush1.bf16.msra.mxu0 0
  %899 = vmatprep.subr.bf16.mxu0 0
  %900 = vmatpush1.bf16.msra.mxu0 0
  %901 = vmatprep.mubr.bf16.mxu0 0
  %902 = vmatmul.mubr.bf16.gmra.mrb[0].mxu0 %v769
  %v903 = vpop.f32.mrb[0].mxu0
  %v904 = vadd.f32 %v820, %v903
  %v905 = vpop.f32.mrb[0].mxu0
  %v906 = vpop.f32.mrb[0].mxu0
  %v907 = vadd.f32 %v820, %v906
  %v908 = vpop.f32.mrb[0].mxu0
  %909 = vmatprep.mubr.bf16.mxu0 0
  %910 = vmatmul.mubr.bf16.gmra.mrb[0].mxu0 %v770
  %v911 = vpop.f32.mrb[0].mxu0
  %v912 = vadd.f32 %v820, %v911
  %v913 = vpop.f32.mrb[0].mxu0
  %v914 = vpop.f32.mrb[0].mxu0
  %v915 = vadd.f32 %v820, %v914
  %v916 = vpop.f32.mrb[0].mxu0
  %917 = vmatprep.mubr.bf16.mxu0 0
  %918 = vmatmul.mubr.bf16.gmra.mrb[0].mxu0 %v771
  %v919 = vpop.f32.mrb[0].mxu0
  %v920 = vadd.f32 %v820, %v919
  %v921 = vpop.f32.mrb[0].mxu0
  %v922 = vpop.f32.mrb[0].mxu0
  %v923 = vadd.f32 %v820, %v922
  %v924 = vpop.f32.mrb[0].mxu0
  %925 = vmatprep.mubr.bf16.mxu0 0
  %926 = vmatmul.mubr.bf16.gmra.mrb[0].mxu0 %v772
  %v927 = vpop.f32.mrb[0].mxu0
  %v928 = vadd.f32 %v820, %v927
  %v929 = vpop.f32.mrb[0].mxu0
  %v930 = vpop.f32.mrb[0].mxu0
  %v931 = vadd.f32 %v820, %v930
  %v932 = vpop.f32.mrb[0].mxu0
  %933 = vmatprep.mubr.bf16.mxu0 0
  %934 = vmatmul.mubr.bf16.gmra.mrb[0].mxu0 %v773
  %v935 = vpop.f32.mrb[0].mxu0
  %v936 = vadd.f32 %v820, %v935
  %v937 = vpop.f32.mrb[0].mxu0
  %v938 = vpop.f32.mrb[0].mxu0
  %v939 = vadd.f32 %v820, %v938
  %v940 = vpop.f32.mrb[0].mxu0
  %941 = vmatprep.mubr.bf16.mxu0 0
  %942 = vmatmul.mubr.bf16.gmra.mrb[0].mxu0 %v774
  %v943 = vpop.f32.mrb[0].mxu0
  %v944 = vadd.f32 %v820, %v943
  %v945 = vpop.f32.mrb[0].mxu0
  %v946 = vpop.f32.mrb[0].mxu0
  %v947 = vadd.f32 %v820, %v946
  %v948 = vpop.f32.mrb[0].mxu0
  %949 = vmatprep.mubr.bf16.mxu0 0
  %950 = vmatmul.mubr.bf16.gmra.mrb[0].mxu0 %v775
  %v951 = vpop.f32.mrb[0].mxu0
  %v952 = vadd.f32 %v820, %v951
  %v953 = vpop.f32.mrb[0].mxu0
  %v954 = vpop.f32.mrb[0].mxu0
  %v955 = vadd.f32 %v820, %v954
  %v956 = vpop.f32.mrb[0].mxu0
  %957 = vmatprep.mubr.bf16.mxu0 0
  %958 = vmatmul.mubr.bf16.gmra.mrb[0].mxu0 %v776
  %v959 = vpop.f32.mrb[0].mxu0
  %v960 = vadd.f32 %v820, %v959
  %v961 = vpop.f32.mrb[0].mxu0
  %v962 = vpop.f32.mrb[0].mxu0
  %v963 = vadd.f32 %v820, %v962
  %v964 = vpop.f32.mrb[0].mxu0
  %965 = vmatprep.mubr.bf16.mxu0 0
  %966 = vmatmul.mubr.bf16.gmra.mrb[0].mxu0 %v777
  %v967 = vpop.f32.mrb[0].mxu0
  %v968 = vadd.f32 %v820, %v967
  %v969 = vpop.f32.mrb[0].mxu0
  %v970 = vpop.f32.mrb[0].mxu0
  %v971 = vadd.f32 %v820, %v970
  %v972 = vpop.f32.mrb[0].mxu0
  %973 = vmatprep.mubr.bf16.mxu0 0
  %974 = vmatmul.mubr.bf16.gmra.mrb[0].mxu0 %v778
  %v975 = vpop.f32.mrb[0].mxu0
  %v976 = vadd.f32 %v820, %v975
  %v977 = vpop.f32.mrb[0].mxu0
  %v978 = vpop.f32.mrb[0].mxu0
  %v979 = vadd.f32 %v820, %v978
  %v980 = vpop.f32.mrb[0].mxu0
  %981 = vmatprep.mubr.bf16.mxu0 0
  %982 = vmatmul.mubr.bf16.gmra.mrb[0].mxu0 %v779
  %v983 = vpop.f32.mrb[0].mxu0
  %v984 = vadd.f32 %v820, %v983
  %v985 = vpop.f32.mrb[0].mxu0
  %v986 = vpop.f32.mrb[0].mxu0
  %v987 = vadd.f32 %v820, %v986
  %v988 = vpop.f32.mrb[0].mxu0
  %989 = vmatprep.mubr.bf16.mxu0 0
  %990 = vmatmul.mubr.bf16.gmra.mrb[0].mxu0 %v780
  %v991 = vpop.f32.mrb[0].mxu0
  %v992 = vadd.f32 %v820, %v991
  %v993 = vpop.f32.mrb[0].mxu0
  %v994 = vpop.f32.mrb[0].mxu0
  %v995 = vadd.f32 %v820, %v994
  %v996 = vpop.f32.mrb[0].mxu0
  %997 = vmatprep.mubr.bf16.mxu0 0
  %998 = vmatmul.mubr.bf16.gmra.mrb[0].mxu0 %v781
  %v999 = vpop.f32.mrb[0].mxu0
  %v1000 = vadd.f32 %v820, %v999
  %v1001 = vpop.f32.mrb[0].mxu0
  %v1002 = vpop.f32.mrb[0].mxu0
  %v1003 = vadd.f32 %v820, %v1002
  %v1004 = vpop.f32.mrb[0].mxu0
  %1005 = vmatprep.mubr.bf16.mxu0 0
  %1006 = vmatmul.mubr.bf16.gmra.mrb[0].mxu0 %v782
  %v1007 = vpop.f32.mrb[0].mxu0
  %v1008 = vadd.f32 %v820, %v1007
  %v1009 = vpop.f32.mrb[0].mxu0
  %v1010 = vpop.f32.mrb[0].mxu0
  %v1011 = vadd.f32 %v820, %v1010
  %v1012 = vpop.f32.mrb[0].mxu0
  %1013 = vmatprep.mubr.bf16.mxu0 0
  %1014 = vmatmul.mubr.bf16.gmra.mrb[0].mxu0 %v783
  %v1015 = vpop.f32.mrb[0].mxu0
  %v1016 = vadd.f32 %v820, %v1015
  %v1017 = vpop.f32.mrb[0].mxu0
  %v1018 = vpop.f32.mrb[0].mxu0
  %v1019 = vadd.f32 %v820, %v1018
  %v1020 = vpop.f32.mrb[0].mxu0
  %1021 = vmatprep.mubr.bf16.mxu0 0
  %1022 = vmatmul.mubr.bf16.gmra.mrb[0].mxu0 %v784
  %v1023 = vpop.f32.mrb[0].mxu0
  %v1024 = vadd.f32 %v820, %v1023
  %v1025 = vpop.f32.mrb[0].mxu0
  %v1026 = vpop.f32.mrb[0].mxu0
  %v1027 = vadd.f32 %v820, %v1026
  %v1028 = vpop.f32.mrb[0].mxu0
  %1029 = vmatprep.mubr.bf16.mxu0 0
  %1030 = vmatmul.mubr.bf16.gmra.mrb[0].mxu0 %v785
  %v1031 = vpop.f32.mrb[0].mxu0
  %v1032 = vadd.f32 %v820, %v1031
  %v1033 = vpop.f32.mrb[0].mxu0
  %v1034 = vpop.f32.mrb[0].mxu0
  %v1035 = vadd.f32 %v820, %v1034
  %v1036 = vpop.f32.mrb[0].mxu0
  %1037 = vmatprep.mubr.bf16.mxu0 0
  %1038 = vmatmul.mubr.bf16.gmra.mrb[0].mxu0 %v786
  %v1039 = vpop.f32.mrb[0].mxu0
  %v1040 = vadd.f32 %v820, %v1039
  %v1041 = vpop.f32.mrb[0].mxu0
  %v1042 = vpop.f32.mrb[0].mxu0
  %v1043 = vadd.f32 %v820, %v1042
  %v1044 = vpop.f32.mrb[0].mxu0
  %1045 = vmatprep.mubr.bf16.mxu0 0
  %1046 = vmatmul.mubr.bf16.gmra.mrb[0].mxu0 %v787
  %v1047 = vpop.f32.mrb[0].mxu0
  %v1048 = vadd.f32 %v820, %v1047
  %v1049 = vpop.f32.mrb[0].mxu0
  %v1050 = vpop.f32.mrb[0].mxu0
  %v1051 = vadd.f32 %v820, %v1050
  %v1052 = vpop.f32.mrb[0].mxu0
  %1053 = vmatprep.mubr.bf16.mxu0 0
  %1054 = vmatmul.mubr.bf16.gmra.mrb[0].mxu0 %v788
  %v1055 = vpop.f32.mrb[0].mxu0
  %v1056 = vadd.f32 %v820, %v1055
  %v1057 = vpop.f32.mrb[0].mxu0
  %v1058 = vpop.f32.mrb[0].mxu0
  %v1059 = vadd.f32 %v820, %v1058
  %v1060 = vpop.f32.mrb[0].mxu0
  %1061 = vmatprep.mubr.bf16.mxu0 0
  %1062 = vmatmul.mubr.bf16.gmra.mrb[0].mxu0 %v789
  %v1063 = vpop.f32.mrb[0].mxu0
  %v1064 = vadd.f32 %v820, %v1063
  %v1065 = vpop.f32.mrb[0].mxu0
  %v1066 = vpop.f32.mrb[0].mxu0
  %v1067 = vadd.f32 %v820, %v1066
  %v1068 = vpop.f32.mrb[0].mxu0
  %1069 = vmatprep.mubr.bf16.mxu0 0
  %1070 = vmatmul.mubr.bf16.gmra.mrb[0].mxu0 %v790
  %v1071 = vpop.f32.mrb[0].mxu0
  %v1072 = vadd.f32 %v820, %v1071
  %v1073 = vpop.f32.mrb[0].mxu0
  %v1074 = vpop.f32.mrb[0].mxu0
  %v1075 = vadd.f32 %v820, %v1074
  %v1076 = vpop.f32.mrb[0].mxu0
  %1077 = vmatprep.mubr.bf16.mxu0 0
  %1078 = vmatmul.mubr.bf16.gmra.mrb[0].mxu0 %v791
  %v1079 = vpop.f32.mrb[0].mxu0
  %v1080 = vadd.f32 %v820, %v1079
  %v1081 = vpop.f32.mrb[0].mxu0
  %v1082 = vpop.f32.mrb[0].mxu0
  %v1083 = vadd.f32 %v820, %v1082
  %v1084 = vpop.f32.mrb[0].mxu0
  %1085 = vmatprep.mubr.bf16.mxu0 0
  %1086 = vmatmul.mubr.bf16.gmra.mrb[0].mxu0 %v792
  %v1087 = vpop.f32.mrb[0].mxu0
  %v1088 = vadd.f32 %v820, %v1087
  %v1089 = vpop.f32.mrb[0].mxu0
  %v1090 = vpop.f32.mrb[0].mxu0
  %v1091 = vadd.f32 %v820, %v1090
  %v1092 = vpop.f32.mrb[0].mxu0
  %1093 = vmatprep.mubr.bf16.mxu0 0
  %1094 = vmatmul.mubr.bf16.gmra.mrb[0].mxu0 %v793
  %v1095 = vpop.f32.mrb[0].mxu0
  %v1096 = vadd.f32 %v820, %v1095
  %v1097 = vpop.f32.mrb[0].mxu0
  %v1098 = vpop.f32.mrb[0].mxu0
  %v1099 = vadd.f32 %v820, %v1098
  %v1100 = vpop.f32.mrb[0].mxu0
  %1101 = vmatprep.mubr.bf16.mxu0 0
  %1102 = vmatmul.mubr.bf16.gmra.mrb[0].mxu0 %v794
  %v1103 = vpop.f32.mrb[0].mxu0
  %v1104 = vadd.f32 %v820, %v1103
  %v1105 = vpop.f32.mrb[0].mxu0
  %v1106 = vpop.f32.mrb[0].mxu0
  %v1107 = vadd.f32 %v820, %v1106
  %v1108 = vpop.f32.mrb[0].mxu0
  %1109 = vmatprep.mubr.bf16.mxu0 0
  %1110 = vmatmul.mubr.bf16.gmra.mrb[0].mxu0 %v795
  %v1111 = vpop.f32.mrb[0].mxu0
  %v1112 = vadd.f32 %v820, %v1111
  %v1113 = vpop.f32.mrb[0].mxu0
  %v1114 = vpop.f32.mrb[0].mxu0
  %v1115 = vadd.f32 %v820, %v1114
  %v1116 = vpop.f32.mrb[0].mxu0
  %1117 = vmatprep.mubr.bf16.mxu0 0
  %1118 = vmatmul.mubr.bf16.gmra.mrb[0].mxu0 %v796
  %v1119 = vpop.f32.mrb[0].mxu0
  %v1120 = vadd.f32 %v820, %v1119
  %v1121 = vpop.f32.mrb[0].mxu0
  %v1122 = vpop.f32.mrb[0].mxu0
  %v1123 = vadd.f32 %v820, %v1122
  %v1124 = vpop.f32.mrb[0].mxu0
  %1125 = vmatprep.mubr.bf16.mxu0 0
  %1126 = vmatmul.mubr.bf16.gmra.mrb[0].mxu0 %v797
  %v1127 = vpop.f32.mrb[0].mxu0
  %v1128 = vadd.f32 %v820, %v1127
  %v1129 = vpop.f32.mrb[0].mxu0
  %v1130 = vpop.f32.mrb[0].mxu0
  %v1131 = vadd.f32 %v820, %v1130
  %v1132 = vpop.f32.mrb[0].mxu0
  %1133 = vmatprep.mubr.bf16.mxu0 0
  %1134 = vmatmul.mubr.bf16.gmra.mrb[0].mxu0 %v798
  %v1135 = vpop.f32.mrb[0].mxu0
  %v1136 = vadd.f32 %v820, %v1135
  %v1137 = vpop.f32.mrb[0].mxu0
  %v1138 = vpop.f32.mrb[0].mxu0
  %v1139 = vadd.f32 %v820, %v1138
  %v1140 = vpop.f32.mrb[0].mxu0
  %1141 = vmatprep.mubr.bf16.mxu0 0
  %1142 = vmatmul.mubr.bf16.gmra.mrb[0].mxu0 %v799
  %v1143 = vpop.f32.mrb[0].mxu0
  %v1144 = vadd.f32 %v820, %v1143
  %v1145 = vpop.f32.mrb[0].mxu0
  %v1146 = vpop.f32.mrb[0].mxu0
  %v1147 = vadd.f32 %v820, %v1146
  %v1148 = vpop.f32.mrb[0].mxu0
  %1149 = vmatprep.mubr.bf16.mxu0 0
  %1150 = vmatmul.mubr.bf16.gmra.mrb[0].mxu0 %v800
  %v1151 = vpop.f32.mrb[0].mxu0
  %v1152 = vadd.f32 %v820, %v1151
  %v1153 = vpop.f32.mrb[0].mxu0
  %v1154 = vpop.f32.mrb[0].mxu0
  %v1155 = vadd.f32 %v820, %v1154
  %v1156 = vpop.f32.mrb[0].mxu0
  %1157 = vdwg.mxu0
  %v1158 = vmax.f32 %v904, 0.0
  %v1159 = vmax.f32 %v907, 0.0
  %v1160 = vmax.f32 %v912, 0.0
  %v1161 = vmax.f32 %v915, 0.0
  %v1162 = vmax.f32 %v920, 0.0
  %v1163 = vmax.f32 %v923, 0.0
  %v1164 = vmax.f32 %v928, 0.0
  %v1165 = vmax.f32 %v931, 0.0
  %v1166 = vmax.f32 %v936, 0.0
  %v1167 = vmax.f32 %v939, 0.0
  %v1168 = vmax.f32 %v944, 0.0
  %v1169 = vmax.f32 %v947, 0.0
  %v1170 = vmax.f32 %v952, 0.0
  %v1171 = vmax.f32 %v955, 0.0
  %v1172 = vmax.f32 %v960, 0.0
  %v1173 = vmax.f32 %v963, 0.0
  %v1174 = vmax.f32 %v968, 0.0
  %v1175 = vmax.f32 %v971, 0.0
  %v1176 = vmax.f32 %v976, 0.0
  %v1177 = vmax.f32 %v979, 0.0
  %v1178 = vmax.f32 %v984, 0.0
  %v1179 = vmax.f32 %v987, 0.0
  %v1180 = vmax.f32 %v992, 0.0
  %v1181 = vmax.f32 %v995, 0.0
  %v1182 = vmax.f32 %v1000, 0.0
  %v1183 = vmax.f32 %v1003, 0.0
  %v1184 = vmax.f32 %v1008, 0.0
  %v1185 = vmax.f32 %v1011, 0.0
  %v1186 = vmax.f32 %v1016, 0.0
  %v1187 = vmax.f32 %v1019, 0.0
  %v1188 = vmax.f32 %v1024, 0.0
  %v1189 = vmax.f32 %v1027, 0.0
  %v1190 = vmax.f32 %v1032, 0.0
  %v1191 = vmax.f32 %v1035, 0.0
  %v1192 = vmax.f32 %v1040, 0.0
  %v1193 = vmax.f32 %v1043, 0.0
  %v1194 = vmax.f32 %v1048, 0.0
  %v1195 = vmax.f32 %v1051, 0.0
  %v1196 = vmax.f32 %v1056, 0.0
  %v1197 = vmax.f32 %v1059, 0.0
  %v1198 = vmax.f32 %v1064, 0.0
  %v1199 = vmax.f32 %v1067, 0.0
  %v1200 = vmax.f32 %v1072, 0.0
  %v1201 = vmax.f32 %v1075, 0.0
  %v1202 = vmax.f32 %v1080, 0.0
  %v1203 = vmax.f32 %v1083, 0.0
  %v1204 = vmax.f32 %v1088, 0.0
  %v1205 = vmax.f32 %v1091, 0.0
  %v1206 = vmax.f32 %v1096, 0.0
  %v1207 = vmax.f32 %v1099, 0.0
  %v1208 = vmax.f32 %v1104, 0.0
  %v1209 = vmax.f32 %v1107, 0.0
  %v1210 = vmax.f32 %v1112, 0.0
  %v1211 = vmax.f32 %v1115, 0.0
  %v1212 = vmax.f32 %v1120, 0.0
  %v1213 = vmax.f32 %v1123, 0.0
  %v1214 = vmax.f32 %v1128, 0.0
  %v1215 = vmax.f32 %v1131, 0.0
  %v1216 = vmax.f32 %v1136, 0.0
  %v1217 = vmax.f32 %v1139, 0.0
  %v1218 = vmax.f32 %v1144, 0.0
  %v1219 = vmax.f32 %v1147, 0.0
  %v1220 = vmax.f32 %v1152, 0.0
  %v1221 = vmax.f32 %v1155, 0.0
  %v1222 = vlaneseq
  %v1223 = vshrl.u32 %v1222, 7
  %v1224 = vsub.s32 0, %v1223
  %v1225 = vrot.slane %v25, %v1224
  %v1226 = vmul.f32 %v1158, %v1225
  %v1227 = vmul.f32 %v1159, %v1225
  %v1228 = vmul.f32 %v1160, %v1225
  %v1229 = vmul.f32 %v1161, %v1225
  %v1230 = vmul.f32 %v1162, %v1225
  %v1231 = vmul.f32 %v1163, %v1225
  %v1232 = vmul.f32 %v1164, %v1225
  %v1233 = vmul.f32 %v1165, %v1225
  %v1234 = vmul.f32 %v1166, %v1225
  %v1235 = vmul.f32 %v1167, %v1225
  %v1236 = vmul.f32 %v1168, %v1225
  %v1237 = vmul.f32 %v1169, %v1225
  %v1238 = vmul.f32 %v1170, %v1225
  %v1239 = vmul.f32 %v1171, %v1225
  %v1240 = vmul.f32 %v1172, %v1225
  %v1241 = vmul.f32 %v1173, %v1225
  %v1242 = vmul.f32 %v1174, %v1225
  %v1243 = vmul.f32 %v1175, %v1225
  %v1244 = vmul.f32 %v1176, %v1225
  %v1245 = vmul.f32 %v1177, %v1225
  %v1246 = vmul.f32 %v1178, %v1225
  %v1247 = vmul.f32 %v1179, %v1225
  %v1248 = vmul.f32 %v1180, %v1225
  %v1249 = vmul.f32 %v1181, %v1225
  %v1250 = vmul.f32 %v1182, %v1225
  %v1251 = vmul.f32 %v1183, %v1225
  %v1252 = vmul.f32 %v1184, %v1225
  %v1253 = vmul.f32 %v1185, %v1225
  %v1254 = vmul.f32 %v1186, %v1225
  %v1255 = vmul.f32 %v1187, %v1225
  %v1256 = vmul.f32 %v1188, %v1225
  %v1257 = vmul.f32 %v1189, %v1225
  %v1258 = vmul.f32 %v1190, %v1225
  %v1259 = vmul.f32 %v1191, %v1225
  %v1260 = vmul.f32 %v1192, %v1225
  %v1261 = vmul.f32 %v1193, %v1225
  %v1262 = vmul.f32 %v1194, %v1225
  %v1263 = vmul.f32 %v1195, %v1225
  %v1264 = vmul.f32 %v1196, %v1225
  %v1265 = vmul.f32 %v1197, %v1225
  %v1266 = vmul.f32 %v1198, %v1225
  %v1267 = vmul.f32 %v1199, %v1225
  %v1268 = vmul.f32 %v1200, %v1225
  %v1269 = vmul.f32 %v1201, %v1225
  %v1270 = vmul.f32 %v1202, %v1225
  %v1271 = vmul.f32 %v1203, %v1225
  %v1272 = vmul.f32 %v1204, %v1225
  %v1273 = vmul.f32 %v1205, %v1225
  %v1274 = vmul.f32 %v1206, %v1225
  %v1275 = vmul.f32 %v1207, %v1225
  %v1276 = vmul.f32 %v1208, %v1225
  %v1277 = vmul.f32 %v1209, %v1225
  %v1278 = vmul.f32 %v1210, %v1225
  %v1279 = vmul.f32 %v1211, %v1225
  %v1280 = vmul.f32 %v1212, %v1225
  %v1281 = vmul.f32 %v1213, %v1225
  %v1282 = vmul.f32 %v1214, %v1225
  %v1283 = vmul.f32 %v1215, %v1225
  %v1284 = vmul.f32 %v1216, %v1225
  %v1285 = vmul.f32 %v1217, %v1225
  %v1286 = vmul.f32 %v1218, %v1225
  %v1287 = vmul.f32 %v1219, %v1225
  %v1288 = vmul.f32 %v1220, %v1225
  %v1289 = vmul.f32 %v1221, %v1225
  %v1290 = vlaneseq
  %v1291 = vshrl.u32 %v1290, 7
  %v1292 = vsub.s32 0, %v1291
  %v1293 = vrot.slane %v26, %v1292
  %v1294 = vadd.f32 %v1226, %v1293
  %v1295 = vadd.f32 %v1227, %v1293
  %v1296 = vadd.f32 %v1228, %v1293
  %v1297 = vadd.f32 %v1229, %v1293
  %v1298 = vadd.f32 %v1230, %v1293
  %v1299 = vadd.f32 %v1231, %v1293
  %v1300 = vadd.f32 %v1232, %v1293
  %v1301 = vadd.f32 %v1233, %v1293
  %v1302 = vadd.f32 %v1234, %v1293
  %v1303 = vadd.f32 %v1235, %v1293
  %v1304 = vadd.f32 %v1236, %v1293
  %v1305 = vadd.f32 %v1237, %v1293
  %v1306 = vadd.f32 %v1238, %v1293
  %v1307 = vadd.f32 %v1239, %v1293
  %v1308 = vadd.f32 %v1240, %v1293
  %v1309 = vadd.f32 %v1241, %v1293
  %v1310 = vadd.f32 %v1242, %v1293
  %v1311 = vadd.f32 %v1243, %v1293
  %v1312 = vadd.f32 %v1244, %v1293
  %v1313 = vadd.f32 %v1245, %v1293
  %v1314 = vadd.f32 %v1246, %v1293
  %v1315 = vadd.f32 %v1247, %v1293
  %v1316 = vadd.f32 %v1248, %v1293
  %v1317 = vadd.f32 %v1249, %v1293
  %v1318 = vadd.f32 %v1250, %v1293
  %v1319 = vadd.f32 %v1251, %v1293
  %v1320 = vadd.f32 %v1252, %v1293
  %v1321 = vadd.f32 %v1253, %v1293
  %v1322 = vadd.f32 %v1254, %v1293
  %v1323 = vadd.f32 %v1255, %v1293
  %v1324 = vadd.f32 %v1256, %v1293
  %v1325 = vadd.f32 %v1257, %v1293
  %v1326 = vadd.f32 %v1258, %v1293
  %v1327 = vadd.f32 %v1259, %v1293
  %v1328 = vadd.f32 %v1260, %v1293
  %v1329 = vadd.f32 %v1261, %v1293
  %v1330 = vadd.f32 %v1262, %v1293
  %v1331 = vadd.f32 %v1263, %v1293
  %v1332 = vadd.f32 %v1264, %v1293
  %v1333 = vadd.f32 %v1265, %v1293
  %v1334 = vadd.f32 %v1266, %v1293
  %v1335 = vadd.f32 %v1267, %v1293
  %v1336 = vadd.f32 %v1268, %v1293
  %v1337 = vadd.f32 %v1269, %v1293
  %v1338 = vadd.f32 %v1270, %v1293
  %v1339 = vadd.f32 %v1271, %v1293
  %v1340 = vadd.f32 %v1272, %v1293
  %v1341 = vadd.f32 %v1273, %v1293
  %v1342 = vadd.f32 %v1274, %v1293
  %v1343 = vadd.f32 %v1275, %v1293
  %v1344 = vadd.f32 %v1276, %v1293
  %v1345 = vadd.f32 %v1277, %v1293
  %v1346 = vadd.f32 %v1278, %v1293
  %v1347 = vadd.f32 %v1279, %v1293
  %v1348 = vadd.f32 %v1280, %v1293
  %v1349 = vadd.f32 %v1281, %v1293
  %v1350 = vadd.f32 %v1282, %v1293
  %v1351 = vadd.f32 %v1283, %v1293
  %v1352 = vadd.f32 %v1284, %v1293
  %v1353 = vadd.f32 %v1285, %v1293
  %v1354 = vadd.f32 %v1286, %v1293
  %v1355 = vadd.f32 %v1287, %v1293
  %v1356 = vadd.f32 %v1288, %v1293
  %v1357 = vadd.f32 %v1289, %v1293
  %v1358 = vpack.c.bf16 %v1295, %v1294
  %v1359 = vpack.c.bf16 %v1297, %v1296
  %v1360 = vpack.c.bf16 %v1299, %v1298
  %v1361 = vpack.c.bf16 %v1301, %v1300
  %v1362 = vpack.c.bf16 %v1303, %v1302
  %v1363 = vpack.c.bf16 %v1305, %v1304
  %v1364 = vpack.c.bf16 %v1307, %v1306
  %v1365 = vpack.c.bf16 %v1309, %v1308
  %v1366 = vpack.c.bf16 %v1311, %v1310
  %v1367 = vpack.c.bf16 %v1313, %v1312
  %v1368 = vpack.c.bf16 %v1315, %v1314
  %v1369 = vpack.c.bf16 %v1317, %v1316
  %v1370 = vpack.c.bf16 %v1319, %v1318
  %v1371 = vpack.c.bf16 %v1321, %v1320
  %v1372 = vpack.c.bf16 %v1323, %v1322
  %v1373 = vpack.c.bf16 %v1325, %v1324
  %v1374 = vpack.c.bf16 %v1327, %v1326
  %v1375 = vpack.c.bf16 %v1329, %v1328
  %v1376 = vpack.c.bf16 %v1331, %v1330
  %v1377 = vpack.c.bf16 %v1333, %v1332
  %v1378 = vpack.c.bf16 %v1335, %v1334
  %v1379 = vpack.c.bf16 %v1337, %v1336
  %v1380 = vpack.c.bf16 %v1339, %v1338
  %v1381 = vpack.c.bf16 %v1341, %v1340
  %v1382 = vpack.c.bf16 %v1343, %v1342
  %v1383 = vpack.c.bf16 %v1345, %v1344
  %v1384 = vpack.c.bf16 %v1347, %v1346
  %v1385 = vpack.c.bf16 %v1349, %v1348
  %v1386 = vpack.c.bf16 %v1351, %v1350
  %v1387 = vpack.c.bf16 %v1353, %v1352
  %v1388 = vpack.c.bf16 %v1355, %v1354
  %v1389 = vpack.c.bf16 %v1357, %v1356
  %v1390 = vld [vmem:[%s4] sm:$0xf]
  %v1391 = vld [vmem:[%s4 + $0x4] sm:$0xf]
  %v1392 = vld [vmem:[%s4 + $0x8] sm:$0xf]
  %v1393 = vld [vmem:[%s4 + $0xc] sm:$0xf]
  %v1394 = vld [vmem:[%s4 + $0x10] sm:$0xf]
  %v1395 = vld [vmem:[%s4 + $0x14] sm:$0xf]
  %v1396 = vld [vmem:[%s4 + $0x18] sm:$0xf]
  %v1397 = vld [vmem:[%s4 + $0x1c] sm:$0xf]
  %v1398 = vld [vmem:[%s4 + $0x20] sm:$0xf]
  %v1399 = vld [vmem:[%s4 + $0x24] sm:$0xf]
  %v1400 = vld [vmem:[%s4 + $0x28] sm:$0xf]
  %v1401 = vld [vmem:[%s4 + $0x2c] sm:$0xf]
  %v1402 = vld [vmem:[%s4 + $0x30] sm:$0xf]
  %v1403 = vld [vmem:[%s4 + $0x34] sm:$0xf]
  %v1404 = vld [vmem:[%s4 + $0x38] sm:$0xf]
  %v1405 = vld [vmem:[%s4 + $0x3c] sm:$0xf]
  %v1406 = vlaneseq
  %v1407 = vshrl.u32 %v1406, 7
  %v1408 = vsub.s32 0, %v1407
  %v1409 = vrot.slane %v27, %v1408
  %v1426 = vunpack.c.l.b16 %v1390
  %v1427 = vunpack.c.l.b16 %v1391
  %v1428 = vunpack.c.l.b16 %v1392
  %v1429 = vunpack.c.l.b16 %v1393
  %v1430 = vunpack.c.l.b16 %v1394
  %v1431 = vunpack.c.l.b16 %v1395
  %v1432 = vunpack.c.l.b16 %v1396
  %v1433 = vunpack.c.l.b16 %v1397
  %v1434 = vunpack.c.l.b16 %v1398
  %v1435 = vunpack.c.l.b16 %v1399
  %v1436 = vunpack.c.l.b16 %v1400
  %v1437 = vunpack.c.l.b16 %v1401
  %v1438 = vunpack.c.l.b16 %v1402
  %v1439 = vunpack.c.l.b16 %v1403
  %v1440 = vunpack.c.l.b16 %v1404
  %v1441 = vunpack.c.l.b16 %v1405
  %v1442 = vpack.c.b16 %v1427, %v1426
  %v1443 = vpack.c.b16 %v1429, %v1428
  %v1444 = vpack.c.b16 %v1431, %v1430
  %v1445 = vpack.c.b16 %v1433, %v1432
  %v1446 = vpack.c.b16 %v1435, %v1434
  %v1447 = vpack.c.b16 %v1437, %v1436
  %v1448 = vpack.c.b16 %v1439, %v1438
  %v1449 = vpack.c.b16 %v1441, %v1440
  %1458 = vmatprep.subr.bf16.mxu0 0
  %1459 = vmatpush1.bf16.msra.mxu0 %v1442
  %1460 = vmatprep.subr.bf16.mxu0 0
  %1461 = vmatpush1.bf16.msra.mxu0 %v1443
  %1462 = vmatprep.subr.bf16.mxu0 0
  %1463 = vmatpush1.bf16.msra.mxu0 %v1444
  %1464 = vmatprep.subr.bf16.mxu0 0
  %1465 = vmatpush1.bf16.msra.mxu0 %v1445
  %1466 = vmatprep.subr.bf16.mxu0 0
  %1467 = vmatpush1.bf16.msra.mxu0 %v1446
  %1468 = vmatprep.subr.bf16.mxu0 0
  %1469 = vmatpush1.bf16.msra.mxu0 %v1447
  %1470 = vmatprep.subr.bf16.mxu0 0
  %1471 = vmatpush1.bf16.msra.mxu0 %v1448
  %1472 = vmatprep.subr.bf16.mxu0 0
  %1473 = vmatpush1.bf16.msra.mxu0 %v1449
  %1474 = vmatprep.subr.bf16.mxu0 0
  %1475 = vmatpush1.bf16.msra.mxu0 0
  %1476 = vmatprep.subr.bf16.mxu0 0
  %1477 = vmatpush1.bf16.msra.mxu0 0
  %1478 = vmatprep.subr.bf16.mxu0 0
  %1479 = vmatpush1.bf16.msra.mxu0 0
  %1480 = vmatprep.subr.bf16.mxu0 0
  %1481 = vmatpush1.bf16.msra.mxu0 0
  %1482 = vmatprep.subr.bf16.mxu0 0
  %1483 = vmatpush1.bf16.msra.mxu0 0
  %1484 = vmatprep.subr.bf16.mxu0 0
  %1485 = vmatpush1.bf16.msra.mxu0 0
  %1486 = vmatprep.subr.bf16.mxu0 0
  %1487 = vmatpush1.bf16.msra.mxu0 0
  %1488 = vmatprep.subr.bf16.mxu0 0
  %1489 = vmatpush1.bf16.msra.mxu0 0
  %1490 = vmatprep.mubr.bf16.mxu0 0
  %1491 = vmatmul.mubr.bf16.gmra.mrb[0].mxu0 %v1358
  %v1492 = vpop.f32.mrb[0].mxu0
  %v1493 = vadd.f32 %v1409, %v1492
  %v1494 = vpop.f32.mrb[0].mxu0
  %v1495 = vpop.f32.mrb[0].mxu0
  %v1496 = vadd.f32 %v1409, %v1495
  %v1497 = vpop.f32.mrb[0].mxu0
  %1498 = vmatprep.mubr.bf16.mxu0 0
  %1499 = vmatmul.mubr.bf16.gmra.mrb[0].mxu0 %v1359
  %v1500 = vpop.f32.mrb[0].mxu0
  %v1501 = vadd.f32 %v1409, %v1500
  %v1502 = vpop.f32.mrb[0].mxu0
  %v1503 = vpop.f32.mrb[0].mxu0
  %v1504 = vadd.f32 %v1409, %v1503
  %v1505 = vpop.f32.mrb[0].mxu0
  %1506 = vmatprep.mubr.bf16.mxu0 0
  %1507 = vmatmul.mubr.bf16.gmra.mrb[0].mxu0 %v1360
  %v1508 = vpop.f32.mrb[0].mxu0
  %v1509 = vadd.f32 %v1409, %v1508
  %v1510 = vpop.f32.mrb[0].mxu0
  %v1511 = vpop.f32.mrb[0].mxu0
  %v1512 = vadd.f32 %v1409, %v1511
  %v1513 = vpop.f32.mrb[0].mxu0
  %1514 = vmatprep.mubr.bf16.mxu0 0
  %1515 = vmatmul.mubr.bf16.gmra.mrb[0].mxu0 %v1361
  %v1516 = vpop.f32.mrb[0].mxu0
  %v1517 = vadd.f32 %v1409, %v1516
  %v1518 = vpop.f32.mrb[0].mxu0
  %v1519 = vpop.f32.mrb[0].mxu0
  %v1520 = vadd.f32 %v1409, %v1519
  %v1521 = vpop.f32.mrb[0].mxu0
  %1522 = vmatprep.mubr.bf16.mxu0 0
  %1523 = vmatmul.mubr.bf16.gmra.mrb[0].mxu0 %v1362
  %v1524 = vpop.f32.mrb[0].mxu0
  %v1525 = vadd.f32 %v1409, %v1524
  %v1526 = vpop.f32.mrb[0].mxu0
  %v1527 = vpop.f32.mrb[0].mxu0
  %v1528 = vadd.f32 %v1409, %v1527
  %v1529 = vpop.f32.mrb[0].mxu0
  %1530 = vmatprep.mubr.bf16.mxu0 0
  %1531 = vmatmul.mubr.bf16.gmra.mrb[0].mxu0 %v1363
  %v1532 = vpop.f32.mrb[0].mxu0
  %v1533 = vadd.f32 %v1409, %v1532
  %v1534 = vpop.f32.mrb[0].mxu0
  %v1535 = vpop.f32.mrb[0].mxu0
  %v1536 = vadd.f32 %v1409, %v1535
  %v1537 = vpop.f32.mrb[0].mxu0
  %1538 = vmatprep.mubr.bf16.mxu0 0
  %1539 = vmatmul.mubr.bf16.gmra.mrb[0].mxu0 %v1364
  %v1540 = vpop.f32.mrb[0].mxu0
  %v1541 = vadd.f32 %v1409, %v1540
  %v1542 = vpop.f32.mrb[0].mxu0
  %v1543 = vpop.f32.mrb[0].mxu0
  %v1544 = vadd.f32 %v1409, %v1543
  %v1545 = vpop.f32.mrb[0].mxu0
  %1546 = vmatprep.mubr.bf16.mxu0 0
  %1547 = vmatmul.mubr.bf16.gmra.mrb[0].mxu0 %v1365
  %v1548 = vpop.f32.mrb[0].mxu0
  %v1549 = vadd.f32 %v1409, %v1548
  %v1550 = vpop.f32.mrb[0].mxu0
  %v1551 = vpop.f32.mrb[0].mxu0
  %v1552 = vadd.f32 %v1409, %v1551
  %v1553 = vpop.f32.mrb[0].mxu0
  %1554 = vmatprep.mubr.bf16.mxu0 0
  %1555 = vmatmul.mubr.bf16.gmra.mrb[0].mxu0 %v1366
  %v1556 = vpop.f32.mrb[0].mxu0
  %v1557 = vadd.f32 %v1409, %v1556
  %v1558 = vpop.f32.mrb[0].mxu0
  %v1559 = vpop.f32.mrb[0].mxu0
  %v1560 = vadd.f32 %v1409, %v1559
  %v1561 = vpop.f32.mrb[0].mxu0
  %1562 = vmatprep.mubr.bf16.mxu0 0
  %1563 = vmatmul.mubr.bf16.gmra.mrb[0].mxu0 %v1367
  %v1564 = vpop.f32.mrb[0].mxu0
  %v1565 = vadd.f32 %v1409, %v1564
  %v1566 = vpop.f32.mrb[0].mxu0
  %v1567 = vpop.f32.mrb[0].mxu0
  %v1568 = vadd.f32 %v1409, %v1567
  %v1569 = vpop.f32.mrb[0].mxu0
  %1570 = vmatprep.mubr.bf16.mxu0 0
  %1571 = vmatmul.mubr.bf16.gmra.mrb[0].mxu0 %v1368
  %v1572 = vpop.f32.mrb[0].mxu0
  %v1573 = vadd.f32 %v1409, %v1572
  %v1574 = vpop.f32.mrb[0].mxu0
  %v1575 = vpop.f32.mrb[0].mxu0
  %v1576 = vadd.f32 %v1409, %v1575
  %v1577 = vpop.f32.mrb[0].mxu0
  %1578 = vmatprep.mubr.bf16.mxu0 0
  %1579 = vmatmul.mubr.bf16.gmra.mrb[0].mxu0 %v1369
  %v1580 = vpop.f32.mrb[0].mxu0
  %v1581 = vadd.f32 %v1409, %v1580
  %v1582 = vpop.f32.mrb[0].mxu0
  %v1583 = vpop.f32.mrb[0].mxu0
  %v1584 = vadd.f32 %v1409, %v1583
  %v1585 = vpop.f32.mrb[0].mxu0
  %1586 = vmatprep.mubr.bf16.mxu0 0
  %1587 = vmatmul.mubr.bf16.gmra.mrb[0].mxu0 %v1370
  %v1588 = vpop.f32.mrb[0].mxu0
  %v1589 = vadd.f32 %v1409, %v1588
  %v1590 = vpop.f32.mrb[0].mxu0
  %v1591 = vpop.f32.mrb[0].mxu0
  %v1592 = vadd.f32 %v1409, %v1591
  %v1593 = vpop.f32.mrb[0].mxu0
  %1594 = vmatprep.mubr.bf16.mxu0 0
  %1595 = vmatmul.mubr.bf16.gmra.mrb[0].mxu0 %v1371
  %v1596 = vpop.f32.mrb[0].mxu0
  %v1597 = vadd.f32 %v1409, %v1596
  %v1598 = vpop.f32.mrb[0].mxu0
  %v1599 = vpop.f32.mrb[0].mxu0
  %v1600 = vadd.f32 %v1409, %v1599
  %v1601 = vpop.f32.mrb[0].mxu0
  %1602 = vmatprep.mubr.bf16.mxu0 0
  %1603 = vmatmul.mubr.bf16.gmra.mrb[0].mxu0 %v1372
  %v1604 = vpop.f32.mrb[0].mxu0
  %v1605 = vadd.f32 %v1409, %v1604
  %v1606 = vpop.f32.mrb[0].mxu0
  %v1607 = vpop.f32.mrb[0].mxu0
  %v1608 = vadd.f32 %v1409, %v1607
  %v1609 = vpop.f32.mrb[0].mxu0
  %1610 = vmatprep.mubr.bf16.mxu0 0
  %1611 = vmatmul.mubr.bf16.gmra.mrb[0].mxu0 %v1373
  %v1612 = vpop.f32.mrb[0].mxu0
  %v1613 = vadd.f32 %v1409, %v1612
  %v1614 = vpop.f32.mrb[0].mxu0
  %v1615 = vpop.f32.mrb[0].mxu0
  %v1616 = vadd.f32 %v1409, %v1615
  %v1617 = vpop.f32.mrb[0].mxu0
  %1618 = vmatprep.mubr.bf16.mxu0 0
  %1619 = vmatmul.mubr.bf16.gmra.mrb[0].mxu0 %v1374
  %v1620 = vpop.f32.mrb[0].mxu0
  %v1621 = vadd.f32 %v1409, %v1620
  %v1622 = vpop.f32.mrb[0].mxu0
  %v1623 = vpop.f32.mrb[0].mxu0
  %v1624 = vadd.f32 %v1409, %v1623
  %v1625 = vpop.f32.mrb[0].mxu0
  %1626 = vmatprep.mubr.bf16.mxu0 0
  %1627 = vmatmul.mubr.bf16.gmra.mrb[0].mxu0 %v1375
  %v1628 = vpop.f32.mrb[0].mxu0
  %v1629 = vadd.f32 %v1409, %v1628
  %v1630 = vpop.f32.mrb[0].mxu0
  %v1631 = vpop.f32.mrb[0].mxu0
  %v1632 = vadd.f32 %v1409, %v1631
  %v1633 = vpop.f32.mrb[0].mxu0
  %1634 = vmatprep.mubr.bf16.mxu0 0
  %1635 = vmatmul.mubr.bf16.gmra.mrb[0].mxu0 %v1376
  %v1636 = vpop.f32.mrb[0].mxu0
  %v1637 = vadd.f32 %v1409, %v1636
  %v1638 = vpop.f32.mrb[0].mxu0
  %v1639 = vpop.f32.mrb[0].mxu0
  %v1640 = vadd.f32 %v1409, %v1639
  %v1641 = vpop.f32.mrb[0].mxu0
  %1642 = vmatprep.mubr.bf16.mxu0 0
  %1643 = vmatmul.mubr.bf16.gmra.mrb[0].mxu0 %v1377
  %v1644 = vpop.f32.mrb[0].mxu0
  %v1645 = vadd.f32 %v1409, %v1644
  %v1646 = vpop.f32.mrb[0].mxu0
  %v1647 = vpop.f32.mrb[0].mxu0
  %v1648 = vadd.f32 %v1409, %v1647
  %v1649 = vpop.f32.mrb[0].mxu0
  %1650 = vmatprep.mubr.bf16.mxu0 0
  %1651 = vmatmul.mubr.bf16.gmra.mrb[0].mxu0 %v1378
  %v1652 = vpop.f32.mrb[0].mxu0
  %v1653 = vadd.f32 %v1409, %v1652
  %v1654 = vpop.f32.mrb[0].mxu0
  %v1655 = vpop.f32.mrb[0].mxu0
  %v1656 = vadd.f32 %v1409, %v1655
  %v1657 = vpop.f32.mrb[0].mxu0
  %1658 = vmatprep.mubr.bf16.mxu0 0
  %1659 = vmatmul.mubr.bf16.gmra.mrb[0].mxu0 %v1379
  %v1660 = vpop.f32.mrb[0].mxu0
  %v1661 = vadd.f32 %v1409, %v1660
  %v1662 = vpop.f32.mrb[0].mxu0
  %v1663 = vpop.f32.mrb[0].mxu0
  %v1664 = vadd.f32 %v1409, %v1663
  %v1665 = vpop.f32.mrb[0].mxu0
  %1666 = vmatprep.mubr.bf16.mxu0 0
  %1667 = vmatmul.mubr.bf16.gmra.mrb[0].mxu0 %v1380
  %v1668 = vpop.f32.mrb[0].mxu0
  %v1669 = vadd.f32 %v1409, %v1668
  %v1670 = vpop.f32.mrb[0].mxu0
  %v1671 = vpop.f32.mrb[0].mxu0
  %v1672 = vadd.f32 %v1409, %v1671
  %v1673 = vpop.f32.mrb[0].mxu0
  %1674 = vmatprep.mubr.bf16.mxu0 0
  %1675 = vmatmul.mubr.bf16.gmra.mrb[0].mxu0 %v1381
  %v1676 = vpop.f32.mrb[0].mxu0
  %v1677 = vadd.f32 %v1409, %v1676
  %v1678 = vpop.f32.mrb[0].mxu0
  %v1679 = vpop.f32.mrb[0].mxu0
  %v1680 = vadd.f32 %v1409, %v1679
  %v1681 = vpop.f32.mrb[0].mxu0
  %1682 = vmatprep.mubr.bf16.mxu0 0
  %1683 = vmatmul.mubr.bf16.gmra.mrb[0].mxu0 %v1382
  %v1684 = vpop.f32.mrb[0].mxu0
  %v1685 = vadd.f32 %v1409, %v1684
  %v1686 = vpop.f32.mrb[0].mxu0
  %v1687 = vpop.f32.mrb[0].mxu0
  %v1688 = vadd.f32 %v1409, %v1687
  %v1689 = vpop.f32.mrb[0].mxu0
  %1690 = vmatprep.mubr.bf16.mxu0 0
  %1691 = vmatmul.mubr.bf16.gmra.mrb[0].mxu0 %v1383
  %v1692 = vpop.f32.mrb[0].mxu0
  %v1693 = vadd.f32 %v1409, %v1692
  %v1694 = vpop.f32.mrb[0].mxu0
  %v1695 = vpop.f32.mrb[0].mxu0
  %v1696 = vadd.f32 %v1409, %v1695
  %v1697 = vpop.f32.mrb[0].mxu0
  %1698 = vmatprep.mubr.bf16.mxu0 0
  %1699 = vmatmul.mubr.bf16.gmra.mrb[0].mxu0 %v1384
  %v1700 = vpop.f32.mrb[0].mxu0
  %v1701 = vadd.f32 %v1409, %v1700
  %v1702 = vpop.f32.mrb[0].mxu0
  %v1703 = vpop.f32.mrb[0].mxu0
  %v1704 = vadd.f32 %v1409, %v1703
  %v1705 = vpop.f32.mrb[0].mxu0
  %1706 = vmatprep.mubr.bf16.mxu0 0
  %1707 = vmatmul.mubr.bf16.gmra.mrb[0].mxu0 %v1385
  %v1708 = vpop.f32.mrb[0].mxu0
  %v1709 = vadd.f32 %v1409, %v1708
  %v1710 = vpop.f32.mrb[0].mxu0
  %v1711 = vpop.f32.mrb[0].mxu0
  %v1712 = vadd.f32 %v1409, %v1711
  %v1713 = vpop.f32.mrb[0].mxu0
  %1714 = vmatprep.mubr.bf16.mxu0 0
  %1715 = vmatmul.mubr.bf16.gmra.mrb[0].mxu0 %v1386
  %v1716 = vpop.f32.mrb[0].mxu0
  %v1717 = vadd.f32 %v1409, %v1716
  %v1718 = vpop.f32.mrb[0].mxu0
  %v1719 = vpop.f32.mrb[0].mxu0
  %v1720 = vadd.f32 %v1409, %v1719
  %v1721 = vpop.f32.mrb[0].mxu0
  %1722 = vmatprep.mubr.bf16.mxu0 0
  %1723 = vmatmul.mubr.bf16.gmra.mrb[0].mxu0 %v1387
  %v1724 = vpop.f32.mrb[0].mxu0
  %v1725 = vadd.f32 %v1409, %v1724
  %v1726 = vpop.f32.mrb[0].mxu0
  %v1727 = vpop.f32.mrb[0].mxu0
  %v1728 = vadd.f32 %v1409, %v1727
  %v1729 = vpop.f32.mrb[0].mxu0
  %1730 = vmatprep.mubr.bf16.mxu0 0
  %1731 = vmatmul.mubr.bf16.gmra.mrb[0].mxu0 %v1388
  %v1732 = vpop.f32.mrb[0].mxu0
  %v1733 = vadd.f32 %v1409, %v1732
  %v1734 = vpop.f32.mrb[0].mxu0
  %v1735 = vpop.f32.mrb[0].mxu0
  %v1736 = vadd.f32 %v1409, %v1735
  %v1737 = vpop.f32.mrb[0].mxu0
  %1738 = vmatprep.mubr.bf16.mxu0 0
  %1739 = vmatmul.mubr.bf16.gmra.mrb[0].mxu0 %v1389
  %v1740 = vpop.f32.mrb[0].mxu0
  %v1741 = vadd.f32 %v1409, %v1740
  %v1742 = vpop.f32.mrb[0].mxu0
  %v1743 = vpop.f32.mrb[0].mxu0
  %v1744 = vadd.f32 %v1409, %v1743
  %v1745 = vpop.f32.mrb[0].mxu0
  %1746 = vdwg.mxu0
  %v1747 = vmax.f32 %v1493, 0.0
  %v1748 = vmax.f32 %v1496, 0.0
  %v1749 = vmax.f32 %v1501, 0.0
  %v1750 = vmax.f32 %v1504, 0.0
  %v1751 = vmax.f32 %v1509, 0.0
  %v1752 = vmax.f32 %v1512, 0.0
  %v1753 = vmax.f32 %v1517, 0.0
  %v1754 = vmax.f32 %v1520, 0.0
  %v1755 = vmax.f32 %v1525, 0.0
  %v1756 = vmax.f32 %v1528, 0.0
  %v1757 = vmax.f32 %v1533, 0.0
  %v1758 = vmax.f32 %v1536, 0.0
  %v1759 = vmax.f32 %v1541, 0.0
  %v1760 = vmax.f32 %v1544, 0.0
  %v1761 = vmax.f32 %v1549, 0.0
  %v1762 = vmax.f32 %v1552, 0.0
  %v1763 = vmax.f32 %v1557, 0.0
  %v1764 = vmax.f32 %v1560, 0.0
  %v1765 = vmax.f32 %v1565, 0.0
  %v1766 = vmax.f32 %v1568, 0.0
  %v1767 = vmax.f32 %v1573, 0.0
  %v1768 = vmax.f32 %v1576, 0.0
  %v1769 = vmax.f32 %v1581, 0.0
  %v1770 = vmax.f32 %v1584, 0.0
  %v1771 = vmax.f32 %v1589, 0.0
  %v1772 = vmax.f32 %v1592, 0.0
  %v1773 = vmax.f32 %v1597, 0.0
  %v1774 = vmax.f32 %v1600, 0.0
  %v1775 = vmax.f32 %v1605, 0.0
  %v1776 = vmax.f32 %v1608, 0.0
  %v1777 = vmax.f32 %v1613, 0.0
  %v1778 = vmax.f32 %v1616, 0.0
  %v1779 = vmax.f32 %v1621, 0.0
  %v1780 = vmax.f32 %v1624, 0.0
  %v1781 = vmax.f32 %v1629, 0.0
  %v1782 = vmax.f32 %v1632, 0.0
  %v1783 = vmax.f32 %v1637, 0.0
  %v1784 = vmax.f32 %v1640, 0.0
  %v1785 = vmax.f32 %v1645, 0.0
  %v1786 = vmax.f32 %v1648, 0.0
  %v1787 = vmax.f32 %v1653, 0.0
  %v1788 = vmax.f32 %v1656, 0.0
  %v1789 = vmax.f32 %v1661, 0.0
  %v1790 = vmax.f32 %v1664, 0.0
  %v1791 = vmax.f32 %v1669, 0.0
  %v1792 = vmax.f32 %v1672, 0.0
  %v1793 = vmax.f32 %v1677, 0.0
  %v1794 = vmax.f32 %v1680, 0.0
  %v1795 = vmax.f32 %v1685, 0.0
  %v1796 = vmax.f32 %v1688, 0.0
  %v1797 = vmax.f32 %v1693, 0.0
  %v1798 = vmax.f32 %v1696, 0.0
  %v1799 = vmax.f32 %v1701, 0.0
  %v1800 = vmax.f32 %v1704, 0.0
  %v1801 = vmax.f32 %v1709, 0.0
  %v1802 = vmax.f32 %v1712, 0.0
  %v1803 = vmax.f32 %v1717, 0.0
  %v1804 = vmax.f32 %v1720, 0.0
  %v1805 = vmax.f32 %v1725, 0.0
  %v1806 = vmax.f32 %v1728, 0.0
  %v1807 = vmax.f32 %v1733, 0.0
  %v1808 = vmax.f32 %v1736, 0.0
  %v1809 = vmax.f32 %v1741, 0.0
  %v1810 = vmax.f32 %v1744, 0.0
  %v1811 = vlaneseq
  %v1812 = vshrl.u32 %v1811, 7
  %v1813 = vsub.s32 0, %v1812
  %v1814 = vrot.slane %v28, %v1813
  %v1815 = vmul.f32 %v1747, %v1814
  %v1816 = vmul.f32 %v1748, %v1814
  %v1817 = vmul.f32 %v1749, %v1814
  %v1818 = vmul.f32 %v1750, %v1814
  %v1819 = vmul.f32 %v1751, %v1814
  %v1820 = vmul.f32 %v1752, %v1814
  %v1821 = vmul.f32 %v1753, %v1814
  %v1822 = vmul.f32 %v1754, %v1814
  %v1823 = vmul.f32 %v1755, %v1814
  %v1824 = vmul.f32 %v1756, %v1814
  %v1825 = vmul.f32 %v1757, %v1814
  %v1826 = vmul.f32 %v1758, %v1814
  %v1827 = vmul.f32 %v1759, %v1814
  %v1828 = vmul.f32 %v1760, %v1814
  %v1829 = vmul.f32 %v1761, %v1814
  %v1830 = vmul.f32 %v1762, %v1814
  %v1831 = vmul.f32 %v1763, %v1814
  %v1832 = vmul.f32 %v1764, %v1814
  %v1833 = vmul.f32 %v1765, %v1814
  %v1834 = vmul.f32 %v1766, %v1814
  %v1835 = vmul.f32 %v1767, %v1814
  %v1836 = vmul.f32 %v1768, %v1814
  %v1837 = vmul.f32 %v1769, %v1814
  %v1838 = vmul.f32 %v1770, %v1814
  %v1839 = vmul.f32 %v1771, %v1814
  %v1840 = vmul.f32 %v1772, %v1814
  %v1841 = vmul.f32 %v1773, %v1814
  %v1842 = vmul.f32 %v1774, %v1814
  %v1843 = vmul.f32 %v1775, %v1814
  %v1844 = vmul.f32 %v1776, %v1814
  %v1845 = vmul.f32 %v1777, %v1814
  %v1846 = vmul.f32 %v1778, %v1814
  %v1847 = vmul.f32 %v1779, %v1814
  %v1848 = vmul.f32 %v1780, %v1814
  %v1849 = vmul.f32 %v1781, %v1814
  %v1850 = vmul.f32 %v1782, %v1814
  %v1851 = vmul.f32 %v1783, %v1814
  %v1852 = vmul.f32 %v1784, %v1814
  %v1853 = vmul.f32 %v1785, %v1814
  %v1854 = vmul.f32 %v1786, %v1814
  %v1855 = vmul.f32 %v1787, %v1814
  %v1856 = vmul.f32 %v1788, %v1814
  %v1857 = vmul.f32 %v1789, %v1814
  %v1858 = vmul.f32 %v1790, %v1814
  %v1859 = vmul.f32 %v1791, %v1814
  %v1860 = vmul.f32 %v1792, %v1814
  %v1861 = vmul.f32 %v1793, %v1814
  %v1862 = vmul.f32 %v1794, %v1814
  %v1863 = vmul.f32 %v1795, %v1814
  %v1864 = vmul.f32 %v1796, %v1814
  %v1865 = vmul.f32 %v1797, %v1814
  %v1866 = vmul.f32 %v1798, %v1814
  %v1867 = vmul.f32 %v1799, %v1814
  %v1868 = vmul.f32 %v1800, %v1814
  %v1869 = vmul.f32 %v1801, %v1814
  %v1870 = vmul.f32 %v1802, %v1814
  %v1871 = vmul.f32 %v1803, %v1814
  %v1872 = vmul.f32 %v1804, %v1814
  %v1873 = vmul.f32 %v1805, %v1814
  %v1874 = vmul.f32 %v1806, %v1814
  %v1875 = vmul.f32 %v1807, %v1814
  %v1876 = vmul.f32 %v1808, %v1814
  %v1877 = vmul.f32 %v1809, %v1814
  %v1878 = vmul.f32 %v1810, %v1814
  %v1879 = vlaneseq
  %v1880 = vshrl.u32 %v1879, 7
  %v1881 = vsub.s32 0, %v1880
  %v1882 = vrot.slane %v29, %v1881
  %v1883 = vadd.f32 %v1815, %v1882
  %v1884 = vadd.f32 %v1816, %v1882
  %v1885 = vadd.f32 %v1817, %v1882
  %v1886 = vadd.f32 %v1818, %v1882
  %v1887 = vadd.f32 %v1819, %v1882
  %v1888 = vadd.f32 %v1820, %v1882
  %v1889 = vadd.f32 %v1821, %v1882
  %v1890 = vadd.f32 %v1822, %v1882
  %v1891 = vadd.f32 %v1823, %v1882
  %v1892 = vadd.f32 %v1824, %v1882
  %v1893 = vadd.f32 %v1825, %v1882
  %v1894 = vadd.f32 %v1826, %v1882
  %v1895 = vadd.f32 %v1827, %v1882
  %v1896 = vadd.f32 %v1828, %v1882
  %v1897 = vadd.f32 %v1829, %v1882
  %v1898 = vadd.f32 %v1830, %v1882
  %v1899 = vadd.f32 %v1831, %v1882
  %v1900 = vadd.f32 %v1832, %v1882
  %v1901 = vadd.f32 %v1833, %v1882
  %v1902 = vadd.f32 %v1834, %v1882
  %v1903 = vadd.f32 %v1835, %v1882
  %v1904 = vadd.f32 %v1836, %v1882
  %v1905 = vadd.f32 %v1837, %v1882
  %v1906 = vadd.f32 %v1838, %v1882
  %v1907 = vadd.f32 %v1839, %v1882
  %v1908 = vadd.f32 %v1840, %v1882
  %v1909 = vadd.f32 %v1841, %v1882
  %v1910 = vadd.f32 %v1842, %v1882
  %v1911 = vadd.f32 %v1843, %v1882
  %v1912 = vadd.f32 %v1844, %v1882
  %v1913 = vadd.f32 %v1845, %v1882
  %v1914 = vadd.f32 %v1846, %v1882
  %v1915 = vadd.f32 %v1847, %v1882
  %v1916 = vadd.f32 %v1848, %v1882
  %v1917 = vadd.f32 %v1849, %v1882
  %v1918 = vadd.f32 %v1850, %v1882
  %v1919 = vadd.f32 %v1851, %v1882
  %v1920 = vadd.f32 %v1852, %v1882
  %v1921 = vadd.f32 %v1853, %v1882
  %v1922 = vadd.f32 %v1854, %v1882
  %v1923 = vadd.f32 %v1855, %v1882
  %v1924 = vadd.f32 %v1856, %v1882
  %v1925 = vadd.f32 %v1857, %v1882
  %v1926 = vadd.f32 %v1858, %v1882
  %v1927 = vadd.f32 %v1859, %v1882
  %v1928 = vadd.f32 %v1860, %v1882
  %v1929 = vadd.f32 %v1861, %v1882
  %v1930 = vadd.f32 %v1862, %v1882
  %v1931 = vadd.f32 %v1863, %v1882
  %v1932 = vadd.f32 %v1864, %v1882
  %v1933 = vadd.f32 %v1865, %v1882
  %v1934 = vadd.f32 %v1866, %v1882
  %v1935 = vadd.f32 %v1867, %v1882
  %v1936 = vadd.f32 %v1868, %v1882
  %v1937 = vadd.f32 %v1869, %v1882
  %v1938 = vadd.f32 %v1870, %v1882
  %v1939 = vadd.f32 %v1871, %v1882
  %v1940 = vadd.f32 %v1872, %v1882
  %v1941 = vadd.f32 %v1873, %v1882
  %v1942 = vadd.f32 %v1874, %v1882
  %v1943 = vadd.f32 %v1875, %v1882
  %v1944 = vadd.f32 %v1876, %v1882
  %v1945 = vadd.f32 %v1877, %v1882
  %v1946 = vadd.f32 %v1878, %v1882
  %v1947 = vlaneseq
  %v1948 = vshrl.u32 %v1947, 7
  %v1949 = vsub.s32 0, %v1948
  %v1950 = vrot.slane %v30, %v1949
  %v1951 = vmul.f32 %v1883, %v1950
  %v1952 = vmul.f32 %v1884, %v1950
  %v1953 = vmul.f32 %v1885, %v1950
  %v1954 = vmul.f32 %v1886, %v1950
  %v1955 = vmul.f32 %v1887, %v1950
  %v1956 = vmul.f32 %v1888, %v1950
  %v1957 = vmul.f32 %v1889, %v1950
  %v1958 = vmul.f32 %v1890, %v1950
  %v1959 = vmul.f32 %v1891, %v1950
  %v1960 = vmul.f32 %v1892, %v1950
  %v1961 = vmul.f32 %v1893, %v1950
  %v1962 = vmul.f32 %v1894, %v1950
  %v1963 = vmul.f32 %v1895, %v1950
  %v1964 = vmul.f32 %v1896, %v1950
  %v1965 = vmul.f32 %v1897, %v1950
  %v1966 = vmul.f32 %v1898, %v1950
  %v1967 = vmul.f32 %v1899, %v1950
  %v1968 = vmul.f32 %v1900, %v1950
  %v1969 = vmul.f32 %v1901, %v1950
  %v1970 = vmul.f32 %v1902, %v1950
  %v1971 = vmul.f32 %v1903, %v1950
  %v1972 = vmul.f32 %v1904, %v1950
  %v1973 = vmul.f32 %v1905, %v1950
  %v1974 = vmul.f32 %v1906, %v1950
  %v1975 = vmul.f32 %v1907, %v1950
  %v1976 = vmul.f32 %v1908, %v1950
  %v1977 = vmul.f32 %v1909, %v1950
  %v1978 = vmul.f32 %v1910, %v1950
  %v1979 = vmul.f32 %v1911, %v1950
  %v1980 = vmul.f32 %v1912, %v1950
  %v1981 = vmul.f32 %v1913, %v1950
  %v1982 = vmul.f32 %v1914, %v1950
  %v1983 = vmul.f32 %v1915, %v1950
  %v1984 = vmul.f32 %v1916, %v1950
  %v1985 = vmul.f32 %v1917, %v1950
  %v1986 = vmul.f32 %v1918, %v1950
  %v1987 = vmul.f32 %v1919, %v1950
  %v1988 = vmul.f32 %v1920, %v1950
  %v1989 = vmul.f32 %v1921, %v1950
  %v1990 = vmul.f32 %v1922, %v1950
  %v1991 = vmul.f32 %v1923, %v1950
  %v1992 = vmul.f32 %v1924, %v1950
  %v1993 = vmul.f32 %v1925, %v1950
  %v1994 = vmul.f32 %v1926, %v1950
  %v1995 = vmul.f32 %v1927, %v1950
  %v1996 = vmul.f32 %v1928, %v1950
  %v1997 = vmul.f32 %v1929, %v1950
  %v1998 = vmul.f32 %v1930, %v1950
  %v1999 = vmul.f32 %v1931, %v1950
  %v2000 = vmul.f32 %v1932, %v1950
  %v2001 = vmul.f32 %v1933, %v1950
  %v2002 = vmul.f32 %v1934, %v1950
  %v2003 = vmul.f32 %v1935, %v1950
  %v2004 = vmul.f32 %v1936, %v1950
  %v2005 = vmul.f32 %v1937, %v1950
  %v2006 = vmul.f32 %v1938, %v1950
  %v2007 = vmul.f32 %v1939, %v1950
  %v2008 = vmul.f32 %v1940, %v1950
  %v2009 = vmul.f32 %v1941, %v1950
  %v2010 = vmul.f32 %v1942, %v1950
  %v2011 = vmul.f32 %v1943, %v1950
  %v2012 = vmul.f32 %v1944, %v1950
  %v2013 = vmul.f32 %v1945, %v1950
  %v2014 = vmul.f32 %v1946, %v1950
  %v2015 = vlaneseq
  %v2016 = vshrl.u32 %v2015, 7
  %v2017 = vsub.s32 0, %v2016
  %v2018 = vrot.slane %v31, %v2017
  %v2019 = vadd.f32 %v1951, %v2018
  %v2020 = vadd.f32 %v1952, %v2018
  %v2021 = vadd.f32 %v1953, %v2018
  %v2022 = vadd.f32 %v1954, %v2018
  %v2023 = vadd.f32 %v1955, %v2018
  %v2024 = vadd.f32 %v1956, %v2018
  %v2025 = vadd.f32 %v1957, %v2018
  %v2026 = vadd.f32 %v1958, %v2018
  %v2027 = vadd.f32 %v1959, %v2018
  %v2028 = vadd.f32 %v1960, %v2018
  %v2029 = vadd.f32 %v1961, %v2018
  %v2030 = vadd.f32 %v1962, %v2018
  %v2031 = vadd.f32 %v1963, %v2018
  %v2032 = vadd.f32 %v1964, %v2018
  %v2033 = vadd.f32 %v1965, %v2018
  %v2034 = vadd.f32 %v1966, %v2018
  %v2035 = vadd.f32 %v1967, %v2018
  %v2036 = vadd.f32 %v1968, %v2018
  %v2037 = vadd.f32 %v1969, %v2018
  %v2038 = vadd.f32 %v1970, %v2018
  %v2039 = vadd.f32 %v1971, %v2018
  %v2040 = vadd.f32 %v1972, %v2018
  %v2041 = vadd.f32 %v1973, %v2018
  %v2042 = vadd.f32 %v1974, %v2018
  %v2043 = vadd.f32 %v1975, %v2018
  %v2044 = vadd.f32 %v1976, %v2018
  %v2045 = vadd.f32 %v1977, %v2018
  %v2046 = vadd.f32 %v1978, %v2018
  %v2047 = vadd.f32 %v1979, %v2018
  %v2048 = vadd.f32 %v1980, %v2018
  %v2049 = vadd.f32 %v1981, %v2018
  %v2050 = vadd.f32 %v1982, %v2018
  %v2051 = vadd.f32 %v1983, %v2018
  %v2052 = vadd.f32 %v1984, %v2018
  %v2053 = vadd.f32 %v1985, %v2018
  %v2054 = vadd.f32 %v1986, %v2018
  %v2055 = vadd.f32 %v1987, %v2018
  %v2056 = vadd.f32 %v1988, %v2018
  %v2057 = vadd.f32 %v1989, %v2018
  %v2058 = vadd.f32 %v1990, %v2018
  %v2059 = vadd.f32 %v1991, %v2018
  %v2060 = vadd.f32 %v1992, %v2018
  %v2061 = vadd.f32 %v1993, %v2018
  %v2062 = vadd.f32 %v1994, %v2018
  %v2063 = vadd.f32 %v1995, %v2018
  %v2064 = vadd.f32 %v1996, %v2018
  %v2065 = vadd.f32 %v1997, %v2018
  %v2066 = vadd.f32 %v1998, %v2018
  %v2067 = vadd.f32 %v1999, %v2018
  %v2068 = vadd.f32 %v2000, %v2018
  %v2069 = vadd.f32 %v2001, %v2018
  %v2070 = vadd.f32 %v2002, %v2018
  %v2071 = vadd.f32 %v2003, %v2018
  %v2072 = vadd.f32 %v2004, %v2018
  %v2073 = vadd.f32 %v2005, %v2018
  %v2074 = vadd.f32 %v2006, %v2018
  %v2075 = vadd.f32 %v2007, %v2018
  %v2076 = vadd.f32 %v2008, %v2018
  %v2077 = vadd.f32 %v2009, %v2018
  %v2078 = vadd.f32 %v2010, %v2018
  %v2079 = vadd.f32 %v2011, %v2018
  %v2080 = vadd.f32 %v2012, %v2018
  %v2081 = vadd.f32 %v2013, %v2018
  %v2082 = vadd.f32 %v2014, %v2018
  %2083 = vxpose.xlu0.b32.start [1/16] %v2019, 128
  %2084 = vxpose.xlu0.b32.cont [2/16] %v2020, 128
  %2085 = vxpose.xlu0.b32.cont [3/16] %v2021, 128
  %2086 = vxpose.xlu0.b32.cont [4/16] %v2022, 128
  %2087 = vxpose.xlu0.b32.cont [5/16] %v2023, 128
  %2088 = vxpose.xlu0.b32.cont [6/16] %v2024, 128
  %2089 = vxpose.xlu0.b32.cont [7/16] %v2025, 128
  %2090 = vxpose.xlu0.b32.cont [8/16] %v2026, 128
  %2091 = vxpose.xlu0.b32.cont [9/16] %v2027, 128
  %2092 = vxpose.xlu0.b32.cont [10/16] %v2028, 128
  %2093 = vxpose.xlu0.b32.cont [11/16] %v2029, 128
  %2094 = vxpose.xlu0.b32.cont [12/16] %v2030, 128
  %2095 = vxpose.xlu0.b32.cont [13/16] %v2031, 128
  %2096 = vxpose.xlu0.b32.cont [14/16] %v2032, 128
  %2097 = vxpose.xlu0.b32.cont [15/16] %v2033, 128
  %2098 = vxpose.xlu0.b32.end [16/16] %v2034, 128
  %v2099 = vpop.trf.xlu0
  %v2100 = vpop.trf.xlu0
  %v2101 = vpop.trf.xlu0
  %v2102 = vpop.trf.xlu0
  %v2103 = vpop.trf.xlu0
  %v2104 = vpop.trf.xlu0
  %v2105 = vpop.trf.xlu0
  %v2106 = vpop.trf.xlu0
  %v2107 = vpop.trf.xlu0
  %v2108 = vpop.trf.xlu0
  %v2109 = vpop.trf.xlu0
  %v2110 = vpop.trf.xlu0
  %v2111 = vpop.trf.xlu0
  %v2112 = vpop.trf.xlu0
  %v2113 = vpop.trf.xlu0
  %v2114 = vpop.trf.xlu0
  %2115 = vxpose.xlu0.b32.start [1/16] %v2035, 128
  %2116 = vxpose.xlu0.b32.cont [2/16] %v2036, 128
  %2117 = vxpose.xlu0.b32.cont [3/16] %v2037, 128
  %2118 = vxpose.xlu0.b32.cont [4/16] %v2038, 128
  %2119 = vxpose.xlu0.b32.cont [5/16] %v2039, 128
  %2120 = vxpose.xlu0.b32.cont [6/16] %v2040, 128
  %2121 = vxpose.xlu0.b32.cont [7/16] %v2041, 128
  %2122 = vxpose.xlu0.b32.cont [8/16] %v2042, 128
  %2123 = vxpose.xlu0.b32.cont [9/16] %v2043, 128
  %2124 = vxpose.xlu0.b32.cont [10/16] %v2044, 128
  %2125 = vxpose.xlu0.b32.cont [11/16] %v2045, 128
  %2126 = vxpose.xlu0.b32.cont [12/16] %v2046, 128
  %2127 = vxpose.xlu0.b32.cont [13/16] %v2047, 128
  %2128 = vxpose.xlu0.b32.cont [14/16] %v2048, 128
  %2129 = vxpose.xlu0.b32.cont [15/16] %v2049, 128
  %2130 = vxpose.xlu0.b32.end [16/16] %v2050, 128
  %v2131 = vpop.trf.xlu0
  %v2132 = vpop.trf.xlu0
  %v2133 = vpop.trf.xlu0
  %v2134 = vpop.trf.xlu0
  %v2135 = vpop.trf.xlu0
  %v2136 = vpop.trf.xlu0
  %v2137 = vpop.trf.xlu0
  %v2138 = vpop.trf.xlu0
  %v2139 = vpop.trf.xlu0
  %v2140 = vpop.trf.xlu0
  %v2141 = vpop.trf.xlu0
  %v2142 = vpop.trf.xlu0
  %v2143 = vpop.trf.xlu0
  %v2144 = vpop.trf.xlu0
  %v2145 = vpop.trf.xlu0
  %v2146 = vpop.trf.xlu0
  %2147 = vxpose.xlu0.b32.start [1/16] %v2051, 128
  %2148 = vxpose.xlu0.b32.cont [2/16] %v2052, 128
  %2149 = vxpose.xlu0.b32.cont [3/16] %v2053, 128
  %2150 = vxpose.xlu0.b32.cont [4/16] %v2054, 128
  %2151 = vxpose.xlu0.b32.cont [5/16] %v2055, 128
  %2152 = vxpose.xlu0.b32.cont [6/16] %v2056, 128
  %2153 = vxpose.xlu0.b32.cont [7/16] %v2057, 128
  %2154 = vxpose.xlu0.b32.cont [8/16] %v2058, 128
  %2155 = vxpose.xlu0.b32.cont [9/16] %v2059, 128
  %2156 = vxpose.xlu0.b32.cont [10/16] %v2060, 128
  %2157 = vxpose.xlu0.b32.cont [11/16] %v2061, 128
  %2158 = vxpose.xlu0.b32.cont [12/16] %v2062, 128
  %2159 = vxpose.xlu0.b32.cont [13/16] %v2063, 128
  %2160 = vxpose.xlu0.b32.cont [14/16] %v2064, 128
  %2161 = vxpose.xlu0.b32.cont [15/16] %v2065, 128
  %2162 = vxpose.xlu0.b32.end [16/16] %v2066, 128
  %v2163 = vpop.trf.xlu0
  %v2164 = vpop.trf.xlu0
  %v2165 = vpop.trf.xlu0
  %v2166 = vpop.trf.xlu0
  %v2167 = vpop.trf.xlu0
  %v2168 = vpop.trf.xlu0
  %v2169 = vpop.trf.xlu0
  %v2170 = vpop.trf.xlu0
  %v2171 = vpop.trf.xlu0
  %v2172 = vpop.trf.xlu0
  %v2173 = vpop.trf.xlu0
  %v2174 = vpop.trf.xlu0
  %v2175 = vpop.trf.xlu0
  %v2176 = vpop.trf.xlu0
  %v2177 = vpop.trf.xlu0
  %v2178 = vpop.trf.xlu0
  %2179 = vxpose.xlu0.b32.start [1/16] %v2067, 128
  %2180 = vxpose.xlu0.b32.cont [2/16] %v2068, 128
  %2181 = vxpose.xlu0.b32.cont [3/16] %v2069, 128
  %2182 = vxpose.xlu0.b32.cont [4/16] %v2070, 128
  %2183 = vxpose.xlu0.b32.cont [5/16] %v2071, 128
  %2184 = vxpose.xlu0.b32.cont [6/16] %v2072, 128
  %2185 = vxpose.xlu0.b32.cont [7/16] %v2073, 128
  %2186 = vxpose.xlu0.b32.cont [8/16] %v2074, 128
  %2187 = vxpose.xlu0.b32.cont [9/16] %v2075, 128
  %2188 = vxpose.xlu0.b32.cont [10/16] %v2076, 128
  %2189 = vxpose.xlu0.b32.cont [11/16] %v2077, 128
  %2190 = vxpose.xlu0.b32.cont [12/16] %v2078, 128
  %2191 = vxpose.xlu0.b32.cont [13/16] %v2079, 128
  %2192 = vxpose.xlu0.b32.cont [14/16] %v2080, 128
  %2193 = vxpose.xlu0.b32.cont [15/16] %v2081, 128
  %2194 = vxpose.xlu0.b32.end [16/16] %v2082, 128
  %v2195 = vpop.trf.xlu0
  %v2196 = vpop.trf.xlu0
  %v2197 = vpop.trf.xlu0
  %v2198 = vpop.trf.xlu0
  %v2199 = vpop.trf.xlu0
  %v2200 = vpop.trf.xlu0
  %v2201 = vpop.trf.xlu0
  %v2202 = vpop.trf.xlu0
  %v2203 = vpop.trf.xlu0
  %v2204 = vpop.trf.xlu0
  %v2205 = vpop.trf.xlu0
  %v2206 = vpop.trf.xlu0
  %v2207 = vpop.trf.xlu0
  %v2208 = vpop.trf.xlu0
  %v2209 = vpop.trf.xlu0
  %v2210 = vpop.trf.xlu0
  %v2211 = vadd.f32 %v2099, %v2100
  %v2212 = vadd.f32 %v2211, %v2101
  %v2213 = vadd.f32 %v2212, %v2102
  %v2214 = vadd.f32 %v2213, %v2103
  %v2215 = vadd.f32 %v2214, %v2104
  %v2216 = vadd.f32 %v2215, %v2105
  %v2217 = vadd.f32 %v2216, %v2106
  %v2218 = vadd.f32 %v2217, %v2107
  %v2219 = vadd.f32 %v2218, %v2108
  %v2220 = vadd.f32 %v2219, %v2109
  %v2221 = vadd.f32 %v2220, %v2110
  %v2222 = vadd.f32 %v2221, %v2111
  %v2223 = vadd.f32 %v2222, %v2112
  %v2224 = vadd.f32 %v2223, %v2113
  %v2225 = vadd.f32 %v2224, %v2114
  %v2226 = vrot.slane %v2225, 4
  %v2227 = vadd.f32 %v2225, %v2226
  %v2228 = vrot.slane %v2227, 2
  %v2229 = vadd.f32 %v2227, %v2228
  %v2230 = vrot.slane %v2229, 1
  %v2231 = vadd.f32 %v2229, %v2230
  %v2232 = vadd.f32 %v2131, %v2132
  %v2233 = vadd.f32 %v2232, %v2133
  %v2234 = vadd.f32 %v2233, %v2134
  %v2235 = vadd.f32 %v2234, %v2135
  %v2236 = vadd.f32 %v2235, %v2136
  %v2237 = vadd.f32 %v2236, %v2137
  %v2238 = vadd.f32 %v2237, %v2138
  %v2239 = vadd.f32 %v2238, %v2139
  %v2240 = vadd.f32 %v2239, %v2140
  %v2241 = vadd.f32 %v2240, %v2141
  %v2242 = vadd.f32 %v2241, %v2142
  %v2243 = vadd.f32 %v2242, %v2143
  %v2244 = vadd.f32 %v2243, %v2144
  %v2245 = vadd.f32 %v2244, %v2145
  %v2246 = vadd.f32 %v2245, %v2146
  %v2247 = vrot.slane %v2246, 4
  %v2248 = vadd.f32 %v2246, %v2247
  %v2249 = vrot.slane %v2248, 2
  %v2250 = vadd.f32 %v2248, %v2249
  %v2251 = vrot.slane %v2250, 1
  %v2252 = vadd.f32 %v2250, %v2251
  %v2253 = vadd.f32 %v2163, %v2164
  %v2254 = vadd.f32 %v2253, %v2165
  %v2255 = vadd.f32 %v2254, %v2166
  %v2256 = vadd.f32 %v2255, %v2167
  %v2257 = vadd.f32 %v2256, %v2168
  %v2258 = vadd.f32 %v2257, %v2169
  %v2259 = vadd.f32 %v2258, %v2170
  %v2260 = vadd.f32 %v2259, %v2171
  %v2261 = vadd.f32 %v2260, %v2172
  %v2262 = vadd.f32 %v2261, %v2173
  %v2263 = vadd.f32 %v2262, %v2174
  %v2264 = vadd.f32 %v2263, %v2175
  %v2265 = vadd.f32 %v2264, %v2176
  %v2266 = vadd.f32 %v2265, %v2177
  %v2267 = vadd.f32 %v2266, %v2178
  %v2268 = vrot.slane %v2267, 4
  %v2269 = vadd.f32 %v2267, %v2268
  %v2270 = vrot.slane %v2269, 2
  %v2271 = vadd.f32 %v2269, %v2270
  %v2272 = vrot.slane %v2271, 1
  %v2273 = vadd.f32 %v2271, %v2272
  %v2274 = vadd.f32 %v2195, %v2196
  %v2275 = vadd.f32 %v2274, %v2197
  %v2276 = vadd.f32 %v2275, %v2198
  %v2277 = vadd.f32 %v2276, %v2199
  %v2278 = vadd.f32 %v2277, %v2200
  %v2279 = vadd.f32 %v2278, %v2201
  %v2280 = vadd.f32 %v2279, %v2202
  %v2281 = vadd.f32 %v2280, %v2203
  %v2282 = vadd.f32 %v2281, %v2204
  %v2283 = vadd.f32 %v2282, %v2205
  %v2284 = vadd.f32 %v2283, %v2206
  %v2285 = vadd.f32 %v2284, %v2207
  %v2286 = vadd.f32 %v2285, %v2208
  %v2287 = vadd.f32 %v2286, %v2209
  %v2288 = vadd.f32 %v2287, %v2210
  %v2289 = vrot.slane %v2288, 4
  %v2290 = vadd.f32 %v2288, %v2289
  %v2291 = vrot.slane %v2290, 2
  %v2292 = vadd.f32 %v2290, %v2291
  %v2293 = vrot.slane %v2292, 1
  %v2294 = vadd.f32 %v2292, %v2293
  %v2299 = vcombine.low %v2231, %v2252
  %v2300 = vcombine.low %v2273, %v2294
  %v2302 = vunpack.c.l.s4 1966171168
  %v2303 = vunpack.c.0.s8 %v2302
  %v2304 = vlaneseq
  %v2305 = vshrl.u32 %v2304, 7
  %v2306 = vsub.s32 %v2303, %v2305
  %v2307 = vrot.slane %v2299, %v2306
  %v2309 = vunpack.c.l.s4 1966171168
  %v2310 = vunpack.c.0.s8 %v2309
  %v2311 = vlaneseq
  %v2312 = vshrl.u32 %v2311, 7
  %v2313 = vsub.s32 %v2310, %v2312
  %v2314 = vrot.slane %v2300, %v2313
  %v2315 = vcombine.low %v2307, %v2314
  %v2317 = vunpack.c.l.s4 1966171168
  %v2318 = vunpack.c.0.s8 %v2317
  %v2319 = vlaneseq
  %v2320 = vshrl.u32 %v2319, 7
  %v2321 = vsub.s32 %v2318, %v2320
  %v2322 = vrot.slane %v2315, %v2321
  %v2324 = vlaneseq
  %vm2325 = vcmp.ge.s32.totalorder %v2324, 0
  %vm2326 = vcmp.lt.s32.totalorder %v2324, 512
  %vm2327 = vmand %vm2325, %vm2326
  %2328 = vst.msk [vmem:[%s6] sm:$0xf] %vm2327, %v2322
  // Predicated region
  $region26: #{match_module_forward.1} parent=0 // pred_check
    _
  $region27: #{match_module_forward.1} parent=0 // pred_check_branch
    %2330 = sbr.rel (0) target = $region29
  $region28: #{match_module_forward.1} parent=0 // pred_region
    _
  $region29: #{match_module_forward.1} parent=0 // pred_fallthru
    _
  // Predicated region
  $region30: #{match_module_forward.1} parent=0 // pred_check
    _
  $region31: #{match_module_forward.1} parent=0 // pred_check_branch
    %2332 = sbr.rel (0) target = $region33
  $region32: #{match_module_forward.1} parent=0 // pred_region
    _
  $region33: #{match_module_forward.1} parent=0 // pred_fallthru
    _

</llo_original>
